<compile_context>
chip_gen: v7x
topology: tpu7x:2x2x1
jax: 0.10.0
libtpu: 0.0.40
codegen_flags: <defaults>
</compile_context>

<pallas_src>
import math

import jax
import jax.numpy as jnp
import numpy as np
from jax.experimental import pallas as pl
from jax.experimental.pallas import tpu as pltpu


def _pe_nerf_kernel(x_ref, sel_ref, phase_ref, o_ref):
    """out = sin(x @ sel + phase), all lane-dense.

    x_ref:     (rows, G*dim_in)        packed points (G points per kernel row)
    sel_ref:   (G*dim_in, G*out_dim)   constant selection matrix with 2^o*pi folded in
    phase_ref: (1, G*out_dim)          0 for the sin half, pi/2 for the cos half
    o_ref:     (rows, G*out_dim)       packed encodings
    """
    scaled = jnp.dot(
        x_ref[...], sel_ref[...],
        preferred_element_type=jnp.float32,
        precision=jax.lax.Precision.HIGHEST,  # keep full f32 precision on the MXU
    )
    # cos(z) == sin(z + pi/2): one fused transcendental pass over all lanes.
    o_ref[...] = jnp.sin(scaled + phase_ref[...]).astype(o_ref.dtype)


def _round_up(x: int, m: int) -> int:
    return (x + m - 1) // m * m


def _build_constants(dim_in: int, num_octaves: int, start_octave: int, group: int):
    """Selection/scale matrix and phase vector for the packed (grouped) layout."""
    d_in, n_oct, g = dim_in, num_octaves, group
    out_dim = 2 * d_in * n_oct
    octaves = np.arange(start_octave, start_octave + n_oct, dtype=np.float64)
    mult = ((2.0 ** octaves) * np.pi).astype(np.float32)  # == f32(pi) * 2^o exactly

    col = np.arange(g * out_dim)
    grp = col // out_dim                      # which of the G packed points
    c = col % out_dim                         # column inside one point's encoding
    half = c // (d_in * n_oct)                # 0 -> sin, 1 -> cos
    d = (c % (d_in * n_oct)) // n_oct         # input dimension
    o = c % n_oct                             # octave
    src = grp * d_in + d                      # source column in the packed input row

    sel = np.zeros((g * d_in, g * out_dim), dtype=np.float32)
    sel[src, col] = mult[o]                   # one non-zero per output column
    phase = (half.astype(np.float32) * np.float32(np.pi / 2.0))[None, :]
    return sel, phase


def positional_encoding_nerf(points: jax.Array,
                             num_octaves: int = 8,
                             start_octave: int = 0,
                             *,
                             group=None,
                             block_rows: int = 512,
                             out_dtype=jnp.float32) -> jax.Array:
    """JAX/Pallas equivalent of PositionalEncodingNeRF(dim_in, num_octaves, start_octave)."""
    points = points.astype(jnp.float32)
    leading = points.shape[:-1]
    dim_in = points.shape[-1]
    out_dim = 2 * dim_in * num_octaves
    n = int(np.prod(leading)) if leading else 1

    if group is None:
        # Smallest grouping that makes the packed output a multiple of 128 lanes.
        group = 128 // math.gcd(out_dim, 128)
    g = group

    sel, phase = _build_constants(dim_in, num_octaves, start_octave, g)

    # Pack G consecutive points per kernel row; pad the point count so the grid
    # tiles evenly (padded rows are discarded afterwards).
    # TODO(synk): the jnp.pad could be replaced by a cdiv grid + masked last tile.
    n_groups = _round_up(max(n, 1), g) // g
    rows_per_block = min(block_rows, _round_up(n_groups, 8))
    n_rows = _round_up(n_groups, rows_per_block)
    n_tot = n_rows * g

    x2d = points.reshape(n, dim_in)
    if n_tot != n:
        x2d = jnp.pad(x2d, ((0, n_tot - n), (0, 0)))
    x_packed = x2d.reshape(n_rows, g * dim_in)        # free, row-major

    grid = (n_rows // rows_per_block,)

    out_packed = pl.pallas_call(
        _pe_nerf_kernel,
        out_shape=jax.ShapeDtypeStruct((n_rows, g * out_dim), out_dtype),
        grid_spec=pltpu.PrefetchScalarGridSpec(
            num_scalar_prefetch=0,
            grid=grid,
            in_specs=[
                pl.BlockSpec((rows_per_block, g * dim_in), lambda i: (i, 0)),
                # Constants: block index never changes -> fetched once, no re-DMA.
                pl.BlockSpec((g * dim_in, g * out_dim), lambda i: (0, 0)),
                pl.BlockSpec((1, g * out_dim), lambda i: (0, 0)),
            ],
            out_specs=pl.BlockSpec((rows_per_block, g * out_dim), lambda i: (i, 0)),
        ),
        compiler_params=pltpu.CompilerParams(
            dimension_semantics=("parallel",)),
    )(x_packed, jnp.asarray(sel), jnp.asarray(phase))

    out = out_packed.reshape(n_tot, out_dim)[:n]      # free, row-major
    return out.reshape(*leading, out_dim)


def _reference(points, num_octaves=8, start_octave=0):
    """Pure-JAX reference mirroring the PyTorch forward exactly."""
    leading = points.shape[:-1]
    octaves = jnp.arange(start_octave, start_octave + num_octaves, dtype=jnp.float32)
    multipliers = 2.0 ** octaves * jnp.pi
    scaled = points[..., None] * multipliers            # (..., D, O)
    sines = jnp.sin(scaled).reshape(*leading, -1)
    cosines = jnp.cos(scaled).reshape(*leading, -1)
    return jnp.concatenate([sines, cosines], axis=-1)


if __name__ == "__main__":
    dim_in, num_octaves, start_octave = 3, 8, 0
    key = jax.random.PRNGKey(0)

    # Main check: small shape consistent with the module.
    points = jax.random.uniform(key, (2, 128, dim_in), dtype=jnp.float32,
                                minval=-1.0, maxval=1.0)
    out = jax.block_until_ready(
        positional_encoding_nerf(points, num_octaves, start_octave))
    ref = _reference(points, num_octaves, start_octave)
    assert out.shape == (2, 128, 2 * dim_in * num_octaves), out.shape
    # Tolerance note: the kernel uses cos(z) = sin(z + pi/2); for the highest
    # octave (|z| ~ 2^7*pi) the f32 phase add / matmul rounding contribute up to
    # ~1e-4 absolute difference vs. computing cos directly (same math, f32 ulps).
    np.testing.assert_allclose(np.asarray(out), np.asarray(ref),
                               rtol=1e-3, atol=5e-4)

    # Odd point count: exercises the group/grid padding path.
    points2 = jax.random.uniform(jax.random.PRNGKey(1), (37, dim_in),
                                 dtype=jnp.float32, minval=-1.0, maxval=1.0)
    out2 = jax.block_until_ready(
        positional_encoding_nerf(points2, num_octaves, start_octave))
    ref2 = _reference(points2, num_octaves, start_octave)
    np.testing.assert_allclose(np.asarray(out2), np.asarray(ref2),
                               rtol=1e-3, atol=5e-4)

    # Non-default octave configuration.
    out3 = jax.block_until_ready(
        positional_encoding_nerf(points2, num_octaves=4, start_octave=2))
    ref3 = _reference(points2, num_octaves=4, start_octave=2)
    np.testing.assert_allclose(np.asarray(out3), np.asarray(ref3),
                               rtol=1e-3, atol=5e-4)

    print("KERNEL_OK")
</pallas_src>

<mosaic_0001>
module attributes {stable_mosaic.version = 11 : i64} {
  func.func @_pe_nerf_kernel(%arg0: i32, %arg1: memref<32x24xf32, #tpu.memory_space<vmem>>, %arg2: memref<24x384xf32, #tpu.memory_space<vmem>>, %arg3: memref<1x384xf32, #tpu.memory_space<vmem>>, %arg4: memref<32x384xf32, #tpu.memory_space<vmem>>) attributes {dimension_semantics = [#tpu.dimension_semantics<parallel>], iteration_bounds = array<i64: 1>, scalar_prefetch = 0 : i64, scratch_operands = 0 : i64, tpu.core_type = #tpu.core_type<tc>, window_params = [{transform_indices = @transform_0, window_bounds = array<i64: 32, 24>}, {pipeline_mode = #tpu.pipeline_mode<synchronous>, transform_indices = @transform_1, window_bounds = array<i64: 24, 384>}, {pipeline_mode = #tpu.pipeline_mode<synchronous>, transform_indices = @transform_2, window_bounds = array<i64: 1, 384>}, {transform_indices = @transform_3, window_bounds = array<i64: 32, 384>}]} {
    %c0 = arith.constant 0 : index
    %c0_0 = arith.constant 0 : index
    %0 = vector.load %arg1[%c0, %c0_0] : memref<32x24xf32, #tpu.memory_space<vmem>>, vector<32x24xf32>
    %c0_1 = arith.constant 0 : index
    %c0_2 = arith.constant 0 : index
    %1 = vector.load %arg2[%c0_1, %c0_2] : memref<24x384xf32, #tpu.memory_space<vmem>>, vector<24x384xf32>
    %cst = arith.constant dense<0.000000e+00> : vector<32x384xf32>
    %2 = tpu.matmul %0, %1, %cst {dimension_numbers = #tpu.dot_dimension_numbers<[1], [0], [0], [1], [0, 0, 1, 1], [], []>, precision = #tpu.contract_precision<fp32>} : vector<32x24xf32>, vector<24x384xf32>, vector<32x384xf32> -> vector<32x384xf32>
    %c0_3 = arith.constant 0 : index
    %c0_4 = arith.constant 0 : index
    %3 = vector.load %arg3[%c0_3, %c0_4] : memref<1x384xf32, #tpu.memory_space<vmem>>, vector<1x384xf32>
    %4 = vector.broadcast %3 : vector<1x384xf32> to vector<32x384xf32>
    %5 = arith.addf %2, %4 : vector<32x384xf32>
    %6 = math.sin %5 : vector<32x384xf32>
    %c0_5 = arith.constant 0 : index
    %c0_6 = arith.constant 0 : index
    %7 = vector.load %arg4[%c0_5, %c0_6] : memref<32x384xf32, #tpu.memory_space<vmem>>, vector<32x384xf32>
    tpu.vector_store %arg4[%c0_5, %c0_6], %6 {strides = array<i32>} : memref<32x384xf32, #tpu.memory_space<vmem>>, vector<32x384xf32>,
    return
  }
  func.func @transform_0(%arg0: i32) -> (i32, i32) {
    %c0_i32 = arith.constant 0 : i32
    %c0_i32_0 = arith.constant 0 : i32
    return %arg0, %c0_i32 : i32, i32
  }
  func.func @transform_1(%arg0: i32) -> (i32, i32) {
    %c0_i32 = arith.constant 0 : i32
    %c0_i32_0 = arith.constant 0 : i32
    %c0_i32_1 = arith.constant 0 : i32
    return %c0_i32, %c0_i32_0 : i32, i32
  }
  func.func @transform_2(%arg0: i32) -> (i32, i32) {
    %c0_i32 = arith.constant 0 : i32
    %c0_i32_0 = arith.constant 0 : i32
    %c0_i32_1 = arith.constant 0 : i32
    return %c0_i32, %c0_i32_0 : i32, i32
  }
  func.func @transform_3(%arg0: i32) -> (i32, i32) {
    %c0_i32 = arith.constant 0 : i32
    %c0_i32_0 = arith.constant 0 : i32
    return %arg0, %c0_i32 : i32, i32
  }
}

</mosaic_0001>

<llo_original>
// kernel: tpu_custom_call.1
$region0: #{tpu_custom_call.1}
  #allocation0 [shape = 'u32[]', space=smem, size = 0x4, offset = 0x4, fixed_abs, tag = 'smem constant byte address 0x4 - core index']
  #allocation1 [shape = 'u32[144,128]{1,0:T(1,128)}', space=vmem, size = 0x12000, scoped, tag = 'internal scratch']
  %s0 = inlined_call_operand.vmem [shape: f32[32,24], index: 0, kind: input, shape index: {}]
  %s1 = inlined_call_operand.hbm [shape: f32[24,384], index: 1, kind: input, shape index: {}]
  %s2 = inlined_call_operand.vmem [shape: f32[1,384], index: 2, kind: input, shape index: {}]
  %s3 = inlined_call_operand.hbm [shape: f32[32,384], index: 3, kind: output, shape index: {}]
  %s4 = sld [smem:[#allocation0]]
  $region26: #{tpu_custom_call.1} parent=0
    _
  %s6 = ssub.s32 1, %s4
  %s7 = scalar_select 0, %s6, %s4
  $region1: #{tpu_custom_call.1} parent=0
    #allocation2 [shape = 'u8[36864]{0}', space=vmem, size = 0x9000, scoped, tag = 'input window, operand 1, single buffered']
    #allocation3 [shape = 's32[1]{0}', space=sflag, size = 0x4, scoped, tag = 'scoped memory for tpu_custom_call.1']
    #allocation4 [shape = 's32[1]{0}', space=sflag, size = 0x4, scoped, tag = 'scoped memory for tpu_custom_call.1']
    #allocation5 [shape = 'u8[49152]{0}', space=vmem, size = 0xc000, scoped, tag = 'output window, operand 0, single buffered']
    %8 = vsyncpa [#allocation3], 0
    %9 = vsyncpa [#allocation4], 0
    // Predicated region
    $region2: #{tpu_custom_call.1} parent=1 // pred_check
      _
    $region3: #{tpu_custom_call.1} parent=1 // pred_check_branch
      %11 = sbr.rel (0) target = $region5
    $region4: #{tpu_custom_call.1} parent=1 // pred_region
      _
    $region5: #{tpu_custom_call.1} parent=1 // pred_fallthru
      _
    // Predicated region
    $region6: #{tpu_custom_call.1} parent=1 // pred_check
      _
    $region7: #{tpu_custom_call.1} parent=1 // pred_check_branch
      %13 = sbr.rel (0) target = $region9
    $region8: #{tpu_custom_call.1} parent=1 // pred_region
      %s15 = ssub.s32 1152, 1152
      %16 = vsyncadd [#allocation3], %s15
      %s17 = sshll.u32 [#allocation2], 4
      %s18 = int_to_ptr.vmem [resolvable:$true] %s17
      %23 = dma.hbm_to_vmem [thread:$0]  %s1, 1152, %s18, [#allocation3], 384, 384, 24
    $region9: #{tpu_custom_call.1} parent=1 // pred_fallthru
      _
    // Predicated region
    $region10: #{tpu_custom_call.1} parent=1 // pred_check
      _
    $region11: #{tpu_custom_call.1} parent=1 // pred_check_branch
      %25 = sbr.rel (0) target = $region13
    $region12: #{tpu_custom_call.1} parent=1 // pred_region
      _
    $region13: #{tpu_custom_call.1} parent=1 // pred_fallthru
      _
    // Predicated region
    $region14: #{tpu_custom_call.1} parent=1 // pred_check
      _
    $region15: #{tpu_custom_call.1} parent=1 // pred_check_branch
      %27 = sbr.rel (0) target = $region17
    $region16: #{tpu_custom_call.1} parent=1 // pred_region
      %28 = dma.done [#allocation3], 1152
    $region17: #{tpu_custom_call.1} parent=1 // pred_fallthru
      _
    %v29 = vld [vmem:[%s0] sm:$0xff]
    %v30 = vld [vmem:[%s0 + $0x8] sm:$0xff]
    %v31 = vld [vmem:[%s0 + $0x10] sm:$0xff]
    %v32 = vld [vmem:[%s0 + $0x18] sm:$0xff]
    %v33 = vld [vmem:[#allocation2] sm:$0xff]
    %v34 = vld [vmem:[#allocation2 + $0x8] sm:$0xff]
    %v35 = vld [vmem:[#allocation2 + $0x10] sm:$0xff]
    %v36 = vld [vmem:[#allocation2 + $0x18] sm:$0xff]
    %v37 = vld [vmem:[#allocation2 + $0x20] sm:$0xff]
    %v38 = vld [vmem:[#allocation2 + $0x28] sm:$0xff]
    %v39 = vld [vmem:[#allocation2 + $0x30] sm:$0xff]
    %v40 = vld [vmem:[#allocation2 + $0x38] sm:$0xff]
    %v41 = vld [vmem:[#allocation2 + $0x40] sm:$0xff]
    %v42 = vld [vmem:[%s2] sm:$0x7]
    %v44 = vlaneseq
    %v45 = vshrl.u32 %v44, 7
    %v46 = vsub.s32 0, %v45
    %v47 = vrot.slane %v42, %v46
    %v48 = vlaneseq
    %v49 = vshrl.u32 %v48, 7
    %v50 = vsub.s32 1, %v49
    %v51 = vrot.slane %v42, %v50
    %v52 = vlaneseq
    %v53 = vshrl.u32 %v52, 7
    %v54 = vsub.s32 2, %v53
    %v55 = vrot.slane %v42, %v54
    %vm59 = vcmask 195584
    %v61 = vsel %vm59, %v29, 0
    %v64 = vsel %vm59, %v30, 0
    %v67 = vsel %vm59, %v31, 0
    %v70 = vsel %vm59, %v32, 0
    %v72 = vand.u32 %v34, 4294901760
    %73 = vmatprep.subr.mxu0 %v72
    %v74 = vand.u32 %v33, 4294901760
    %75 = vmatpush1.msra.mxu0 %v74
    %v76 = vand.u32 %v37, 4294901760
    %77 = vmatprep.subr.mxu0 %v76
    %v78 = vand.u32 %v36, 4294901760
    %79 = vmatpush1.msra.mxu0 %v78
    %v80 = vand.u32 %v40, 4294901760
    %81 = vmatprep.subr.mxu0 %v80
    %v82 = vand.u32 %v39, 4294901760
    %83 = vmatpush1.msra.mxu0 %v82
    %84 = vmatprep.subr.mxu0 0.0
    %85 = vmatpush1.msra.mxu0 0.0
    %86 = vmatprep.subr.mxu0 0.0
    %87 = vmatpush1.msra.mxu0 0.0
    %88 = vmatprep.subr.mxu0 0.0
    %89 = vmatpush1.msra.mxu0 0.0
    %90 = vmatprep.subr.mxu0 0.0
    %91 = vmatpush1.msra.mxu0 0.0
    %92 = vmatprep.subr.mxu0 0.0
    %93 = vmatpush1.msra.mxu0 0.0
    %94 = vmatprep.subr.mxu0 0.0
    %95 = vmatpush1.msra.mxu0 0.0
    %96 = vmatprep.subr.mxu0 0.0
    %97 = vmatpush1.msra.mxu0 0.0
    %98 = vmatprep.subr.mxu0 0.0
    %99 = vmatpush1.msra.mxu0 0.0
    %100 = vmatprep.subr.mxu0 0.0
    %101 = vmatpush1.msra.mxu0 0.0
    %102 = vmatprep.subr.mxu0 0.0
    %103 = vmatpush1.msra.mxu0 0.0
    %104 = vmatprep.subr.mxu0 0.0
    %105 = vmatpush1.msra.mxu0 0.0
    %106 = vmatprep.subr.mxu0 0.0
    %107 = vmatpush1.msra.mxu0 0.0
    %108 = vmatprep.subr.mxu0 0.0
    %109 = vmatpush1.msra.mxu0 0.0
    %110 = vmatprep.subr.mxu0 0.0
    %111 = vmatpush1.msra.mxu0 0.0
    %112 = vmatprep.subr.mxu0 0.0
    %113 = vmatpush1.msra.mxu0 0.0
    %114 = vmatprep.subr.mxu0 0.0
    %115 = vmatpush1.msra.mxu0 0.0
    %116 = vmatprep.subr.mxu0 0.0
    %117 = vmatpush1.msra.mxu0 0.0
    %118 = vmatprep.subr.mxu0 0.0
    %119 = vmatpush1.msra.mxu0 0.0
    %120 = vmatprep.subr.mxu0 0.0
    %121 = vmatpush1.msra.mxu0 0.0
    %122 = vmatprep.subr.mxu0 0.0
    %123 = vmatpush1.msra.mxu0 0.0
    %124 = vmatprep.subr.mxu0 0.0
    %125 = vmatpush1.msra.mxu0 0.0
    %126 = vmatprep.subr.mxu0 0.0
    %127 = vmatpush1.msra.mxu0 0.0
    %128 = vmatprep.subr.mxu0 0.0
    %129 = vmatpush1.msra.mxu0 0.0
    %130 = vmatprep.subr.mxu0 0.0
    %131 = vmatpush1.msra.mxu0 0.0
    %132 = vmatprep.subr.mxu0 0.0
    %133 = vmatpush1.msra.mxu0 0.0
    %134 = vmatprep.subr.mxu0 0.0
    %135 = vmatpush1.msra.mxu0 0.0
    %136 = vmatprep.subr.mxu0 0.0
    %137 = vmatpush1.msra.mxu0 0.0
    %138 = vmatprep.subr.mxu0 0.0
    %139 = vmatpush1.msra.mxu0 0.0
    %140 = vmatprep.subr.mxu0 0.0
    %141 = vmatpush1.msra.mxu0 0.0
    %142 = vmatprep.mubr.f32.mxu0 0.0
    %v143 = vand.u32 %v61, 4294901760
    %v144 = vsub.f32 %v61, %v143
    %v145 = vand.u32 %v144, 4294901760
    %v146 = vsub.f32 %v144, %v145
    %v147 = vand.u32 %v146, 4294901760
    %148 = vmatmul.mubr.f32.gmra.mrb[0].mxu0 %v147
    %v149 = vpop.f32.mrb[0].mxu0
    %v150 = vadd.f32 %v47, %v149
    %v151 = vpop.f32.mrb[0].mxu0
    %v152 = vadd.f32 %v51, %v151
    %153 = vmatprep.mubr.f32.mxu0 0.0
    %v154 = vand.u32 %v64, 4294901760
    %v155 = vsub.f32 %v64, %v154
    %v156 = vand.u32 %v155, 4294901760
    %v157 = vsub.f32 %v155, %v156
    %v158 = vand.u32 %v157, 4294901760
    %159 = vmatmul.mubr.f32.gmra.mrb[0].mxu0 %v158
    %v160 = vpop.f32.mrb[0].mxu0
    %v161 = vadd.f32 %v47, %v160
    %v162 = vpop.f32.mrb[0].mxu0
    %v163 = vadd.f32 %v51, %v162
    %164 = vmatprep.mubr.f32.mxu0 0.0
    %v165 = vand.u32 %v67, 4294901760
    %v166 = vsub.f32 %v67, %v165
    %v167 = vand.u32 %v166, 4294901760
    %v168 = vsub.f32 %v166, %v167
    %v169 = vand.u32 %v168, 4294901760
    %170 = vmatmul.mubr.f32.gmra.mrb[0].mxu0 %v169
    %v171 = vpop.f32.mrb[0].mxu0
    %v172 = vadd.f32 %v47, %v171
    %v173 = vpop.f32.mrb[0].mxu0
    %v174 = vadd.f32 %v51, %v173
    %175 = vmatprep.mubr.f32.mxu0 0.0
    %v176 = vand.u32 %v70, 4294901760
    %v177 = vsub.f32 %v70, %v176
    %v178 = vand.u32 %v177, 4294901760
    %v179 = vsub.f32 %v177, %v178
    %v180 = vand.u32 %v179, 4294901760
    %181 = vmatmul.mubr.f32.gmra.mrb[0].mxu0 %v180
    %v182 = vpop.f32.mrb[0].mxu0
    %v183 = vadd.f32 %v47, %v182
    %v184 = vpop.f32.mrb[0].mxu0
    %v185 = vadd.f32 %v51, %v184
    %186 = vdwg.mxu0
    %v187 = vand.u32 %v34, 4294901760
    %v188 = vsub.f32 %v34, %v187
    %v189 = vand.u32 %v188, 4294901760
    %v190 = vsub.f32 %v188, %v189
    %v191 = vand.u32 %v190, 4294901760
    %192 = vmatprep.subr.mxu0 %v191
    %v193 = vand.u32 %v33, 4294901760
    %v194 = vsub.f32 %v33, %v193
    %v195 = vand.u32 %v194, 4294901760
    %v196 = vsub.f32 %v194, %v195
    %v197 = vand.u32 %v196, 4294901760
    %198 = vmatpush1.msra.mxu0 %v197
    %v199 = vand.u32 %v37, 4294901760
    %v200 = vsub.f32 %v37, %v199
    %v201 = vand.u32 %v200, 4294901760
    %v202 = vsub.f32 %v200, %v201
    %v203 = vand.u32 %v202, 4294901760
    %204 = vmatprep.subr.mxu0 %v203
    %v205 = vand.u32 %v36, 4294901760
    %v206 = vsub.f32 %v36, %v205
    %v207 = vand.u32 %v206, 4294901760
    %v208 = vsub.f32 %v206, %v207
    %v209 = vand.u32 %v208, 4294901760
    %210 = vmatpush1.msra.mxu0 %v209
    %v211 = vand.u32 %v40, 4294901760
    %v212 = vsub.f32 %v40, %v211
    %v213 = vand.u32 %v212, 4294901760
    %v214 = vsub.f32 %v212, %v213
    %v215 = vand.u32 %v214, 4294901760
    %216 = vmatprep.subr.mxu0 %v215
    %v217 = vand.u32 %v39, 4294901760
    %v218 = vsub.f32 %v39, %v217
    %v219 = vand.u32 %v218, 4294901760
    %v220 = vsub.f32 %v218, %v219
    %v221 = vand.u32 %v220, 4294901760
    %222 = vmatpush1.msra.mxu0 %v221
    %223 = vmatprep.subr.mxu0 0.0
    %224 = vmatpush1.msra.mxu0 0.0
    %225 = vmatprep.subr.mxu0 0.0
    %226 = vmatpush1.msra.mxu0 0.0
    %227 = vmatprep.subr.mxu0 0.0
    %228 = vmatpush1.msra.mxu0 0.0
    %229 = vmatprep.subr.mxu0 0.0
    %230 = vmatpush1.msra.mxu0 0.0
    %231 = vmatprep.subr.mxu0 0.0
    %232 = vmatpush1.msra.mxu0 0.0
    %233 = vmatprep.subr.mxu0 0.0
    %234 = vmatpush1.msra.mxu0 0.0
    %235 = vmatprep.subr.mxu0 0.0
    %236 = vmatpush1.msra.mxu0 0.0
    %237 = vmatprep.subr.mxu0 0.0
    %238 = vmatpush1.msra.mxu0 0.0
    %239 = vmatprep.subr.mxu0 0.0
    %240 = vmatpush1.msra.mxu0 0.0
    %241 = vmatprep.subr.mxu0 0.0
    %242 = vmatpush1.msra.mxu0 0.0
    %243 = vmatprep.subr.mxu0 0.0
    %244 = vmatpush1.msra.mxu0 0.0
    %245 = vmatprep.subr.mxu0 0.0
    %246 = vmatpush1.msra.mxu0 0.0
    %247 = vmatprep.subr.mxu0 0.0
    %248 = vmatpush1.msra.mxu0 0.0
    %249 = vmatprep.subr.mxu0 0.0
    %250 = vmatpush1.msra.mxu0 0.0
    %251 = vmatprep.subr.mxu0 0.0
    %252 = vmatpush1.msra.mxu0 0.0
    %253 = vmatprep.subr.mxu0 0.0
    %254 = vmatpush1.msra.mxu0 0.0
    %255 = vmatprep.subr.mxu0 0.0
    %256 = vmatpush1.msra.mxu0 0.0
    %257 = vmatprep.subr.mxu0 0.0
    %258 = vmatpush1.msra.mxu0 0.0
    %259 = vmatprep.subr.mxu0 0.0
    %260 = vmatpush1.msra.mxu0 0.0
    %261 = vmatprep.subr.mxu0 0.0
    %262 = vmatpush1.msra.mxu0 0.0
    %263 = vmatprep.subr.mxu0 0.0
    %264 = vmatpush1.msra.mxu0 0.0
    %265 = vmatprep.subr.mxu0 0.0
    %266 = vmatpush1.msra.mxu0 0.0
    %267 = vmatprep.subr.mxu0 0.0
    %268 = vmatpush1.msra.mxu0 0.0
    %269 = vmatprep.subr.mxu0 0.0
    %270 = vmatpush1.msra.mxu0 0.0
    %271 = vmatprep.subr.mxu0 0.0
    %272 = vmatpush1.msra.mxu0 0.0
    %273 = vmatprep.subr.mxu0 0.0
    %274 = vmatpush1.msra.mxu0 0.0
    %275 = vmatprep.subr.mxu0 0.0
    %276 = vmatpush1.msra.mxu0 0.0
    %277 = vmatprep.subr.mxu0 0.0
    %278 = vmatpush1.msra.mxu0 0.0
    %279 = vmatprep.subr.mxu0 0.0
    %280 = vmatpush1.msra.mxu0 0.0
    %281 = vmatprep.mubr.f32.mxu0 0.0
    %v282 = vand.u32 %v61, 4294901760
    %283 = vmatmul.mubr.f32.gmra.mrb[0].mxu0 %v282
    %v284 = vpop.f32.mrb[0].mxu0
    %v285 = vadd.f32 %v150, %v284
    %v286 = vpop.f32.mrb[0].mxu0
    %v287 = vadd.f32 %v152, %v286
    %288 = vmatprep.mubr.f32.mxu0 0.0
    %v289 = vand.u32 %v64, 4294901760
    %290 = vmatmul.mubr.f32.gmra.mrb[0].mxu0 %v289
    %v291 = vpop.f32.mrb[0].mxu0
    %v292 = vadd.f32 %v161, %v291
    %v293 = vpop.f32.mrb[0].mxu0
    %v294 = vadd.f32 %v163, %v293
    %295 = vmatprep.mubr.f32.mxu0 0.0
    %v296 = vand.u32 %v67, 4294901760
    %297 = vmatmul.mubr.f32.gmra.mrb[0].mxu0 %v296
    %v298 = vpop.f32.mrb[0].mxu0
    %v299 = vadd.f32 %v172, %v298
    %v300 = vpop.f32.mrb[0].mxu0
    %v301 = vadd.f32 %v174, %v300
    %302 = vmatprep.mubr.f32.mxu0 0.0
    %v303 = vand.u32 %v70, 4294901760
    %304 = vmatmul.mubr.f32.gmra.mrb[0].mxu0 %v303
    %v305 = vpop.f32.mrb[0].mxu0
    %v306 = vadd.f32 %v183, %v305
    %v307 = vpop.f32.mrb[0].mxu0
    %v308 = vadd.f32 %v185, %v307
    %309 = vdwg.mxu0
    %v310 = vand.u32 %v34, 4294901760
    %v311 = vsub.f32 %v34, %v310
    %312 = vmatprep.subr.mxu0 %v311
    %v313 = vand.u32 %v33, 4294901760
    %v314 = vsub.f32 %v33, %v313
    %315 = vmatpush1.msra.mxu0 %v314
    %v316 = vand.u32 %v37, 4294901760
    %v317 = vsub.f32 %v37, %v316
    %318 = vmatprep.subr.mxu0 %v317
    %v319 = vand.u32 %v36, 4294901760
    %v320 = vsub.f32 %v36, %v319
    %321 = vmatpush1.msra.mxu0 %v320
    %v322 = vand.u32 %v40, 4294901760
    %v323 = vsub.f32 %v40, %v322
    %324 = vmatprep.subr.mxu0 %v323
    %v325 = vand.u32 %v39, 4294901760
    %v326 = vsub.f32 %v39, %v325
    %327 = vmatpush1.msra.mxu0 %v326
    %328 = vmatprep.subr.mxu0 0.0
    %329 = vmatpush1.msra.mxu0 0.0
    %330 = vmatprep.subr.mxu0 0.0
    %331 = vmatpush1.msra.mxu0 0.0
    %332 = vmatprep.subr.mxu0 0.0
    %333 = vmatpush1.msra.mxu0 0.0
    %334 = vmatprep.subr.mxu0 0.0
    %335 = vmatpush1.msra.mxu0 0.0
    %336 = vmatprep.subr.mxu0 0.0
    %337 = vmatpush1.msra.mxu0 0.0
    %338 = vmatprep.subr.mxu0 0.0
    %339 = vmatpush1.msra.mxu0 0.0
    %340 = vmatprep.subr.mxu0 0.0
    %341 = vmatpush1.msra.mxu0 0.0
    %342 = vmatprep.subr.mxu0 0.0
    %343 = vmatpush1.msra.mxu0 0.0
    %344 = vmatprep.subr.mxu0 0.0
    %345 = vmatpush1.msra.mxu0 0.0
    %346 = vmatprep.subr.mxu0 0.0
    %347 = vmatpush1.msra.mxu0 0.0
    %348 = vmatprep.subr.mxu0 0.0
    %349 = vmatpush1.msra.mxu0 0.0
    %350 = vmatprep.subr.mxu0 0.0
    %351 = vmatpush1.msra.mxu0 0.0
    %352 = vmatprep.subr.mxu0 0.0
    %353 = vmatpush1.msra.mxu0 0.0
    %354 = vmatprep.subr.mxu0 0.0
    %355 = vmatpush1.msra.mxu0 0.0
    %356 = vmatprep.subr.mxu0 0.0
    %357 = vmatpush1.msra.mxu0 0.0
    %358 = vmatprep.subr.mxu0 0.0
    %359 = vmatpush1.msra.mxu0 0.0
    %360 = vmatprep.subr.mxu0 0.0
    %361 = vmatpush1.msra.mxu0 0.0
    %362 = vmatprep.subr.mxu0 0.0
    %363 = vmatpush1.msra.mxu0 0.0
    %364 = vmatprep.subr.mxu0 0.0
    %365 = vmatpush1.msra.mxu0 0.0
    %366 = vmatprep.subr.mxu0 0.0
    %367 = vmatpush1.msra.mxu0 0.0
    %368 = vmatprep.subr.mxu0 0.0
    %369 = vmatpush1.msra.mxu0 0.0
    %370 = vmatprep.subr.mxu0 0.0
    %371 = vmatpush1.msra.mxu0 0.0
    %372 = vmatprep.subr.mxu0 0.0
    %373 = vmatpush1.msra.mxu0 0.0
    %374 = vmatprep.subr.mxu0 0.0
    %375 = vmatpush1.msra.mxu0 0.0
    %376 = vmatprep.subr.mxu0 0.0
    %377 = vmatpush1.msra.mxu0 0.0
    %378 = vmatprep.subr.mxu0 0.0
    %379 = vmatpush1.msra.mxu0 0.0
    %380 = vmatprep.subr.mxu0 0.0
    %381 = vmatpush1.msra.mxu0 0.0
    %382 = vmatprep.subr.mxu0 0.0
    %383 = vmatpush1.msra.mxu0 0.0
    %384 = vmatprep.subr.mxu0 0.0
    %385 = vmatpush1.msra.mxu0 0.0
    %386 = vmatprep.mubr.f32.mxu0 0.0
    %v387 = vand.u32 %v61, 4294901760
    %v388 = vsub.f32 %v61, %v387
    %389 = vmatmul.mubr.f32.gmra.mrb[0].mxu0 %v388
    %v390 = vpop.f32.mrb[0].mxu0
    %v391 = vadd.f32 %v285, %v390
    %v392 = vpop.f32.mrb[0].mxu0
    %v393 = vadd.f32 %v287, %v392
    %394 = vmatprep.mubr.f32.mxu0 0.0
    %v395 = vand.u32 %v64, 4294901760
    %v396 = vsub.f32 %v64, %v395
    %397 = vmatmul.mubr.f32.gmra.mrb[0].mxu0 %v396
    %v398 = vpop.f32.mrb[0].mxu0
    %v399 = vadd.f32 %v292, %v398
    %v400 = vpop.f32.mrb[0].mxu0
    %v401 = vadd.f32 %v294, %v400
    %402 = vmatprep.mubr.f32.mxu0 0.0
    %v403 = vand.u32 %v67, 4294901760
    %v404 = vsub.f32 %v67, %v403
    %405 = vmatmul.mubr.f32.gmra.mrb[0].mxu0 %v404
    %v406 = vpop.f32.mrb[0].mxu0
    %v407 = vadd.f32 %v299, %v406
    %v408 = vpop.f32.mrb[0].mxu0
    %v409 = vadd.f32 %v301, %v408
    %410 = vmatprep.mubr.f32.mxu0 0.0
    %v411 = vand.u32 %v70, 4294901760
    %v412 = vsub.f32 %v70, %v411
    %413 = vmatmul.mubr.f32.gmra.mrb[0].mxu0 %v412
    %v414 = vpop.f32.mrb[0].mxu0
    %v415 = vadd.f32 %v306, %v414
    %v416 = vpop.f32.mrb[0].mxu0
    %v417 = vadd.f32 %v308, %v416
    %418 = vdwg.mxu0
    %v419 = vand.u32 %v34, 4294901760
    %420 = vmatprep.subr.mxu0 %v419
    %v421 = vand.u32 %v33, 4294901760
    %422 = vmatpush1.msra.mxu0 %v421
    %v423 = vand.u32 %v37, 4294901760
    %424 = vmatprep.subr.mxu0 %v423
    %v425 = vand.u32 %v36, 4294901760
    %426 = vmatpush1.msra.mxu0 %v425
    %v427 = vand.u32 %v40, 4294901760
    %428 = vmatprep.subr.mxu0 %v427
    %v429 = vand.u32 %v39, 4294901760
    %430 = vmatpush1.msra.mxu0 %v429
    %431 = vmatprep.subr.mxu0 0.0
    %432 = vmatpush1.msra.mxu0 0.0
    %433 = vmatprep.subr.mxu0 0.0
    %434 = vmatpush1.msra.mxu0 0.0
    %435 = vmatprep.subr.mxu0 0.0
    %436 = vmatpush1.msra.mxu0 0.0
    %437 = vmatprep.subr.mxu0 0.0
    %438 = vmatpush1.msra.mxu0 0.0
    %439 = vmatprep.subr.mxu0 0.0
    %440 = vmatpush1.msra.mxu0 0.0
    %441 = vmatprep.subr.mxu0 0.0
    %442 = vmatpush1.msra.mxu0 0.0
    %443 = vmatprep.subr.mxu0 0.0
    %444 = vmatpush1.msra.mxu0 0.0
    %445 = vmatprep.subr.mxu0 0.0
    %446 = vmatpush1.msra.mxu0 0.0
    %447 = vmatprep.subr.mxu0 0.0
    %448 = vmatpush1.msra.mxu0 0.0
    %449 = vmatprep.subr.mxu0 0.0
    %450 = vmatpush1.msra.mxu0 0.0
    %451 = vmatprep.subr.mxu0 0.0
    %452 = vmatpush1.msra.mxu0 0.0
    %453 = vmatprep.subr.mxu0 0.0
    %454 = vmatpush1.msra.mxu0 0.0
    %455 = vmatprep.subr.mxu0 0.0
    %456 = vmatpush1.msra.mxu0 0.0
    %457 = vmatprep.subr.mxu0 0.0
    %458 = vmatpush1.msra.mxu0 0.0
    %459 = vmatprep.subr.mxu0 0.0
    %460 = vmatpush1.msra.mxu0 0.0
    %461 = vmatprep.subr.mxu0 0.0
    %462 = vmatpush1.msra.mxu0 0.0
    %463 = vmatprep.subr.mxu0 0.0
    %464 = vmatpush1.msra.mxu0 0.0
    %465 = vmatprep.subr.mxu0 0.0
    %466 = vmatpush1.msra.mxu0 0.0
    %467 = vmatprep.subr.mxu0 0.0
    %468 = vmatpush1.msra.mxu0 0.0
    %469 = vmatprep.subr.mxu0 0.0
    %470 = vmatpush1.msra.mxu0 0.0
    %471 = vmatprep.subr.mxu0 0.0
    %472 = vmatpush1.msra.mxu0 0.0
    %473 = vmatprep.subr.mxu0 0.0
    %474 = vmatpush1.msra.mxu0 0.0
    %475 = vmatprep.subr.mxu0 0.0
    %476 = vmatpush1.msra.mxu0 0.0
    %477 = vmatprep.subr.mxu0 0.0
    %478 = vmatpush1.msra.mxu0 0.0
    %479 = vmatprep.subr.mxu0 0.0
    %480 = vmatpush1.msra.mxu0 0.0
    %481 = vmatprep.subr.mxu0 0.0
    %482 = vmatpush1.msra.mxu0 0.0
    %483 = vmatprep.subr.mxu0 0.0
    %484 = vmatpush1.msra.mxu0 0.0
    %485 = vmatprep.subr.mxu0 0.0
    %486 = vmatpush1.msra.mxu0 0.0
    %487 = vmatprep.subr.mxu0 0.0
    %488 = vmatpush1.msra.mxu0 0.0
    %489 = vmatprep.mubr.f32.mxu0 0.0
    %v490 = vand.u32 %v61, 4294901760
    %v491 = vsub.f32 %v61, %v490
    %v492 = vand.u32 %v491, 4294901760
    %493 = vmatmul.mubr.f32.gmra.mrb[0].mxu0 %v492
    %v494 = vpop.f32.mrb[0].mxu0
    %v495 = vadd.f32 %v391, %v494
    %v496 = vpop.f32.mrb[0].mxu0
    %v497 = vadd.f32 %v393, %v496
    %498 = vmatprep.mubr.f32.mxu0 0.0
    %v499 = vand.u32 %v64, 4294901760
    %v500 = vsub.f32 %v64, %v499
    %v501 = vand.u32 %v500, 4294901760
    %502 = vmatmul.mubr.f32.gmra.mrb[0].mxu0 %v501
    %v503 = vpop.f32.mrb[0].mxu0
    %v504 = vadd.f32 %v399, %v503
    %v505 = vpop.f32.mrb[0].mxu0
    %v506 = vadd.f32 %v401, %v505
    %507 = vmatprep.mubr.f32.mxu0 0.0
    %v508 = vand.u32 %v67, 4294901760
    %v509 = vsub.f32 %v67, %v508
    %v510 = vand.u32 %v509, 4294901760
    %511 = vmatmul.mubr.f32.gmra.mrb[0].mxu0 %v510
    %v512 = vpop.f32.mrb[0].mxu0
    %v513 = vadd.f32 %v407, %v512
    %v514 = vpop.f32.mrb[0].mxu0
    %v515 = vadd.f32 %v409, %v514
    %516 = vmatprep.mubr.f32.mxu0 0.0
    %v517 = vand.u32 %v70, 4294901760
    %v518 = vsub.f32 %v70, %v517
    %v519 = vand.u32 %v518, 4294901760
    %520 = vmatmul.mubr.f32.gmra.mrb[0].mxu0 %v519
    %v521 = vpop.f32.mrb[0].mxu0
    %v522 = vadd.f32 %v415, %v521
    %v523 = vpop.f32.mrb[0].mxu0
    %v524 = vadd.f32 %v417, %v523
    %525 = vdwg.mxu0
    %v526 = vand.u32 %v34, 4294901760
    %v527 = vsub.f32 %v34, %v526
    %v528 = vand.u32 %v527, 4294901760
    %529 = vmatprep.subr.mxu0 %v528
    %v530 = vand.u32 %v33, 4294901760
    %v531 = vsub.f32 %v33, %v530
    %v532 = vand.u32 %v531, 4294901760
    %533 = vmatpush1.msra.mxu0 %v532
    %v534 = vand.u32 %v37, 4294901760
    %v535 = vsub.f32 %v37, %v534
    %v536 = vand.u32 %v535, 4294901760
    %537 = vmatprep.subr.mxu0 %v536
    %v538 = vand.u32 %v36, 4294901760
    %v539 = vsub.f32 %v36, %v538
    %v540 = vand.u32 %v539, 4294901760
    %541 = vmatpush1.msra.mxu0 %v540
    %v542 = vand.u32 %v40, 4294901760
    %v543 = vsub.f32 %v40, %v542
    %v544 = vand.u32 %v543, 4294901760
    %545 = vmatprep.subr.mxu0 %v544
    %v546 = vand.u32 %v39, 4294901760
    %v547 = vsub.f32 %v39, %v546
    %v548 = vand.u32 %v547, 4294901760
    %549 = vmatpush1.msra.mxu0 %v548
    %550 = vmatprep.subr.mxu0 0.0
    %551 = vmatpush1.msra.mxu0 0.0
    %552 = vmatprep.subr.mxu0 0.0
    %553 = vmatpush1.msra.mxu0 0.0
    %554 = vmatprep.subr.mxu0 0.0
    %555 = vmatpush1.msra.mxu0 0.0
    %556 = vmatprep.subr.mxu0 0.0
    %557 = vmatpush1.msra.mxu0 0.0
    %558 = vmatprep.subr.mxu0 0.0
    %559 = vmatpush1.msra.mxu0 0.0
    %560 = vmatprep.subr.mxu0 0.0
    %561 = vmatpush1.msra.mxu0 0.0
    %562 = vmatprep.subr.mxu0 0.0
    %563 = vmatpush1.msra.mxu0 0.0
    %564 = vmatprep.subr.mxu0 0.0
    %565 = vmatpush1.msra.mxu0 0.0
    %566 = vmatprep.subr.mxu0 0.0
    %567 = vmatpush1.msra.mxu0 0.0
    %568 = vmatprep.subr.mxu0 0.0
    %569 = vmatpush1.msra.mxu0 0.0
    %570 = vmatprep.subr.mxu0 0.0
    %571 = vmatpush1.msra.mxu0 0.0
    %572 = vmatprep.subr.mxu0 0.0
    %573 = vmatpush1.msra.mxu0 0.0
    %574 = vmatprep.subr.mxu0 0.0
    %575 = vmatpush1.msra.mxu0 0.0
    %576 = vmatprep.subr.mxu0 0.0
    %577 = vmatpush1.msra.mxu0 0.0
    %578 = vmatprep.subr.mxu0 0.0
    %579 = vmatpush1.msra.mxu0 0.0
    %580 = vmatprep.subr.mxu0 0.0
    %581 = vmatpush1.msra.mxu0 0.0
    %582 = vmatprep.subr.mxu0 0.0
    %583 = vmatpush1.msra.mxu0 0.0
    %584 = vmatprep.subr.mxu0 0.0
    %585 = vmatpush1.msra.mxu0 0.0
    %586 = vmatprep.subr.mxu0 0.0
    %587 = vmatpush1.msra.mxu0 0.0
    %588 = vmatprep.subr.mxu0 0.0
    %589 = vmatpush1.msra.mxu0 0.0
    %590 = vmatprep.subr.mxu0 0.0
    %591 = vmatpush1.msra.mxu0 0.0
    %592 = vmatprep.subr.mxu0 0.0
    %593 = vmatpush1.msra.mxu0 0.0
    %594 = vmatprep.subr.mxu0 0.0
    %595 = vmatpush1.msra.mxu0 0.0
    %596 = vmatprep.subr.mxu0 0.0
    %597 = vmatpush1.msra.mxu0 0.0
    %598 = vmatprep.subr.mxu0 0.0
    %599 = vmatpush1.msra.mxu0 0.0
    %600 = vmatprep.subr.mxu0 0.0
    %601 = vmatpush1.msra.mxu0 0.0
    %602 = vmatprep.subr.mxu0 0.0
    %603 = vmatpush1.msra.mxu0 0.0
    %604 = vmatprep.subr.mxu0 0.0
    %605 = vmatpush1.msra.mxu0 0.0
    %606 = vmatprep.subr.mxu0 0.0
    %607 = vmatpush1.msra.mxu0 0.0
    %608 = vmatprep.mubr.f32.mxu0 0.0
    %v609 = vand.u32 %v61, 4294901760
    %610 = vmatmul.mubr.f32.gmra.mrb[0].mxu0 %v609
    %v611 = vpop.f32.mrb[0].mxu0
    %v612 = vadd.f32 %v495, %v611
    %v613 = vpop.f32.mrb[0].mxu0
    %v614 = vadd.f32 %v497, %v613
    %615 = vmatprep.mubr.f32.mxu0 0.0
    %v616 = vand.u32 %v64, 4294901760
    %617 = vmatmul.mubr.f32.gmra.mrb[0].mxu0 %v616
    %v618 = vpop.f32.mrb[0].mxu0
    %v619 = vadd.f32 %v504, %v618
    %v620 = vpop.f32.mrb[0].mxu0
    %v621 = vadd.f32 %v506, %v620
    %622 = vmatprep.mubr.f32.mxu0 0.0
    %v623 = vand.u32 %v67, 4294901760
    %624 = vmatmul.mubr.f32.gmra.mrb[0].mxu0 %v623
    %v625 = vpop.f32.mrb[0].mxu0
    %v626 = vadd.f32 %v513, %v625
    %v627 = vpop.f32.mrb[0].mxu0
    %v628 = vadd.f32 %v515, %v627
    %629 = vmatprep.mubr.f32.mxu0 0.0
    %v630 = vand.u32 %v70, 4294901760
    %631 = vmatmul.mubr.f32.gmra.mrb[0].mxu0 %v630
    %v632 = vpop.f32.mrb[0].mxu0
    %v633 = vadd.f32 %v522, %v632
    %v634 = vpop.f32.mrb[0].mxu0
    %v635 = vadd.f32 %v524, %v634
    %636 = vdwg.mxu0
    %v637 = vand.u32 %v34, 4294901760
    %638 = vmatprep.subr.mxu0 %v637
    %v639 = vand.u32 %v33, 4294901760
    %640 = vmatpush1.msra.mxu0 %v639
    %v641 = vand.u32 %v37, 4294901760
    %642 = vmatprep.subr.mxu0 %v641
    %v643 = vand.u32 %v36, 4294901760
    %644 = vmatpush1.msra.mxu0 %v643
    %v645 = vand.u32 %v40, 4294901760
    %646 = vmatprep.subr.mxu0 %v645
    %v647 = vand.u32 %v39, 4294901760
    %648 = vmatpush1.msra.mxu0 %v647
    %649 = vmatprep.subr.mxu0 0.0
    %650 = vmatpush1.msra.mxu0 0.0
    %651 = vmatprep.subr.mxu0 0.0
    %652 = vmatpush1.msra.mxu0 0.0
    %653 = vmatprep.subr.mxu0 0.0
    %654 = vmatpush1.msra.mxu0 0.0
    %655 = vmatprep.subr.mxu0 0.0
    %656 = vmatpush1.msra.mxu0 0.0
    %657 = vmatprep.subr.mxu0 0.0
    %658 = vmatpush1.msra.mxu0 0.0
    %659 = vmatprep.subr.mxu0 0.0
    %660 = vmatpush1.msra.mxu0 0.0
    %661 = vmatprep.subr.mxu0 0.0
    %662 = vmatpush1.msra.mxu0 0.0
    %663 = vmatprep.subr.mxu0 0.0
    %664 = vmatpush1.msra.mxu0 0.0
    %665 = vmatprep.subr.mxu0 0.0
    %666 = vmatpush1.msra.mxu0 0.0
    %667 = vmatprep.subr.mxu0 0.0
    %668 = vmatpush1.msra.mxu0 0.0
    %669 = vmatprep.subr.mxu0 0.0
    %670 = vmatpush1.msra.mxu0 0.0
    %671 = vmatprep.subr.mxu0 0.0
    %672 = vmatpush1.msra.mxu0 0.0
    %673 = vmatprep.subr.mxu0 0.0
    %674 = vmatpush1.msra.mxu0 0.0
    %675 = vmatprep.subr.mxu0 0.0
    %676 = vmatpush1.msra.mxu0 0.0
    %677 = vmatprep.subr.mxu0 0.0
    %678 = vmatpush1.msra.mxu0 0.0
    %679 = vmatprep.subr.mxu0 0.0
    %680 = vmatpush1.msra.mxu0 0.0
    %681 = vmatprep.subr.mxu0 0.0
    %682 = vmatpush1.msra.mxu0 0.0
    %683 = vmatprep.subr.mxu0 0.0
    %684 = vmatpush1.msra.mxu0 0.0
    %685 = vmatprep.subr.mxu0 0.0
    %686 = vmatpush1.msra.mxu0 0.0
    %687 = vmatprep.subr.mxu0 0.0
    %688 = vmatpush1.msra.mxu0 0.0
    %689 = vmatprep.subr.mxu0 0.0
    %690 = vmatpush1.msra.mxu0 0.0
    %691 = vmatprep.subr.mxu0 0.0
    %692 = vmatpush1.msra.mxu0 0.0
    %693 = vmatprep.subr.mxu0 0.0
    %694 = vmatpush1.msra.mxu0 0.0
    %695 = vmatprep.subr.mxu0 0.0
    %696 = vmatpush1.msra.mxu0 0.0
    %697 = vmatprep.subr.mxu0 0.0
    %698 = vmatpush1.msra.mxu0 0.0
    %699 = vmatprep.subr.mxu0 0.0
    %700 = vmatpush1.msra.mxu0 0.0
    %701 = vmatprep.subr.mxu0 0.0
    %702 = vmatpush1.msra.mxu0 0.0
    %703 = vmatprep.subr.mxu0 0.0
    %704 = vmatpush1.msra.mxu0 0.0
    %705 = vmatprep.subr.mxu0 0.0
    %706 = vmatpush1.msra.mxu0 0.0
    %707 = vmatprep.mubr.f32.mxu0 0.0
    %v708 = vand.u32 %v61, 4294901760
    %709 = vmatmul.mubr.f32.gmra.mrb[0].mxu0 %v708
    %v710 = vpop.f32.mrb[0].mxu0
    %v711 = vadd.f32 %v612, %v710
    %v712 = vpop.f32.mrb[0].mxu0
    %v713 = vadd.f32 %v614, %v712
    %714 = vmatprep.mubr.f32.mxu0 0.0
    %v715 = vand.u32 %v64, 4294901760
    %716 = vmatmul.mubr.f32.gmra.mrb[0].mxu0 %v715
    %v717 = vpop.f32.mrb[0].mxu0
    %v718 = vadd.f32 %v619, %v717
    %v719 = vpop.f32.mrb[0].mxu0
    %v720 = vadd.f32 %v621, %v719
    %721 = vmatprep.mubr.f32.mxu0 0.0
    %v722 = vand.u32 %v67, 4294901760
    %723 = vmatmul.mubr.f32.gmra.mrb[0].mxu0 %v722
    %v724 = vpop.f32.mrb[0].mxu0
    %v725 = vadd.f32 %v626, %v724
    %v726 = vpop.f32.mrb[0].mxu0
    %v727 = vadd.f32 %v628, %v726
    %728 = vmatprep.mubr.f32.mxu0 0.0
    %v729 = vand.u32 %v70, 4294901760
    %730 = vmatmul.mubr.f32.gmra.mrb[0].mxu0 %v729
    %v731 = vpop.f32.mrb[0].mxu0
    %v732 = vadd.f32 %v633, %v731
    %v733 = vpop.f32.mrb[0].mxu0
    %v734 = vadd.f32 %v635, %v733
    %735 = vdwg.mxu0
    %736 = vmatprep.subr.mxu0 0.0
    %v737 = vand.u32 %v35, 4294901760
    %738 = vmatpush1.msra.mxu0 %v737
    %739 = vmatprep.subr.mxu0 0.0
    %v740 = vand.u32 %v38, 4294901760
    %741 = vmatpush1.msra.mxu0 %v740
    %742 = vmatprep.subr.mxu0 0.0
    %v743 = vand.u32 %v41, 4294901760
    %744 = vmatpush1.msra.mxu0 %v743
    %745 = vmatprep.subr.mxu0 0.0
    %746 = vmatpush1.msra.mxu0 0.0
    %747 = vmatprep.subr.mxu0 0.0
    %748 = vmatpush1.msra.mxu0 0.0
    %749 = vmatprep.subr.mxu0 0.0
    %750 = vmatpush1.msra.mxu0 0.0
    %751 = vmatprep.subr.mxu0 0.0
    %752 = vmatpush1.msra.mxu0 0.0
    %753 = vmatprep.subr.mxu0 0.0
    %754 = vmatpush1.msra.mxu0 0.0
    %755 = vmatprep.subr.mxu0 0.0
    %756 = vmatpush1.msra.mxu0 0.0
    %757 = vmatprep.subr.mxu0 0.0
    %758 = vmatpush1.msra.mxu0 0.0
    %759 = vmatprep.subr.mxu0 0.0
    %760 = vmatpush1.msra.mxu0 0.0
    %761 = vmatprep.subr.mxu0 0.0
    %762 = vmatpush1.msra.mxu0 0.0
    %763 = vmatprep.subr.mxu0 0.0
    %764 = vmatpush1.msra.mxu0 0.0
    %765 = vmatprep.subr.mxu0 0.0
    %766 = vmatpush1.msra.mxu0 0.0
    %767 = vmatprep.subr.mxu0 0.0
    %768 = vmatpush1.msra.mxu0 0.0
    %769 = vmatprep.subr.mxu0 0.0
    %770 = vmatpush1.msra.mxu0 0.0
    %771 = vmatprep.subr.mxu0 0.0
    %772 = vmatpush1.msra.mxu0 0.0
    %773 = vmatprep.subr.mxu0 0.0
    %774 = vmatpush1.msra.mxu0 0.0
    %775 = vmatprep.subr.mxu0 0.0
    %776 = vmatpush1.msra.mxu0 0.0
    %777 = vmatprep.subr.mxu0 0.0
    %778 = vmatpush1.msra.mxu0 0.0
    %779 = vmatprep.subr.mxu0 0.0
    %780 = vmatpush1.msra.mxu0 0.0
    %781 = vmatprep.subr.mxu0 0.0
    %782 = vmatpush1.msra.mxu0 0.0
    %783 = vmatprep.subr.mxu0 0.0
    %784 = vmatpush1.msra.mxu0 0.0
    %785 = vmatprep.subr.mxu0 0.0
    %786 = vmatpush1.msra.mxu0 0.0
    %787 = vmatprep.subr.mxu0 0.0
    %788 = vmatpush1.msra.mxu0 0.0
    %789 = vmatprep.subr.mxu0 0.0
    %790 = vmatpush1.msra.mxu0 0.0
    %791 = vmatprep.subr.mxu0 0.0
    %792 = vmatpush1.msra.mxu0 0.0
    %793 = vmatprep.subr.mxu0 0.0
    %794 = vmatpush1.msra.mxu0 0.0
    %795 = vmatprep.subr.mxu0 0.0
    %796 = vmatpush1.msra.mxu0 0.0
    %797 = vmatprep.subr.mxu0 0.0
    %798 = vmatpush1.msra.mxu0 0.0
    %799 = vmatprep.subr.mxu0 0.0
    %800 = vmatpush1.msra.mxu0 0.0
    %801 = vmatprep.subr.mxu0 0.0
    %802 = vmatpush1.msra.mxu0 0.0
    %803 = vmatprep.mubr.f32.mxu0 0.0
    %v804 = vand.u32 %v61, 4294901760
    %v805 = vsub.f32 %v61, %v804
    %v806 = vand.u32 %v805, 4294901760
    %v807 = vsub.f32 %v805, %v806
    %v808 = vand.u32 %v807, 4294901760
    %809 = vmatmul.mubr.f32.gmra.mrb[0].mxu0 %v808
    %v810 = vpop.f32.mrb[0].mxu0
    %v811 = vadd.f32 %v55, %v810
    %v812 = vpop.f32.mrb[0].mxu0
    %813 = vmatprep.mubr.f32.mxu0 0.0
    %v814 = vand.u32 %v64, 4294901760
    %v815 = vsub.f32 %v64, %v814
    %v816 = vand.u32 %v815, 4294901760
    %v817 = vsub.f32 %v815, %v816
    %v818 = vand.u32 %v817, 4294901760
    %819 = vmatmul.mubr.f32.gmra.mrb[0].mxu0 %v818
    %v820 = vpop.f32.mrb[0].mxu0
    %v821 = vadd.f32 %v55, %v820
    %v822 = vpop.f32.mrb[0].mxu0
    %823 = vmatprep.mubr.f32.mxu0 0.0
    %v824 = vand.u32 %v67, 4294901760
    %v825 = vsub.f32 %v67, %v824
    %v826 = vand.u32 %v825, 4294901760
    %v827 = vsub.f32 %v825, %v826
    %v828 = vand.u32 %v827, 4294901760
    %829 = vmatmul.mubr.f32.gmra.mrb[0].mxu0 %v828
    %v830 = vpop.f32.mrb[0].mxu0
    %v831 = vadd.f32 %v55, %v830
    %v832 = vpop.f32.mrb[0].mxu0
    %833 = vmatprep.mubr.f32.mxu0 0.0
    %v834 = vand.u32 %v70, 4294901760
    %v835 = vsub.f32 %v70, %v834
    %v836 = vand.u32 %v835, 4294901760
    %v837 = vsub.f32 %v835, %v836
    %v838 = vand.u32 %v837, 4294901760
    %839 = vmatmul.mubr.f32.gmra.mrb[0].mxu0 %v838
    %v840 = vpop.f32.mrb[0].mxu0
    %v841 = vadd.f32 %v55, %v840
    %v842 = vpop.f32.mrb[0].mxu0
    %843 = vdwg.mxu0
    %844 = vmatprep.subr.mxu0 0.0
    %v845 = vand.u32 %v35, 4294901760
    %v846 = vsub.f32 %v35, %v845
    %v847 = vand.u32 %v846, 4294901760
    %v848 = vsub.f32 %v846, %v847
    %v849 = vand.u32 %v848, 4294901760
    %850 = vmatpush1.msra.mxu0 %v849
    %851 = vmatprep.subr.mxu0 0.0
    %v852 = vand.u32 %v38, 4294901760
    %v853 = vsub.f32 %v38, %v852
    %v854 = vand.u32 %v853, 4294901760
    %v855 = vsub.f32 %v853, %v854
    %v856 = vand.u32 %v855, 4294901760
    %857 = vmatpush1.msra.mxu0 %v856
    %858 = vmatprep.subr.mxu0 0.0
    %v859 = vand.u32 %v41, 4294901760
    %v860 = vsub.f32 %v41, %v859
    %v861 = vand.u32 %v860, 4294901760
    %v862 = vsub.f32 %v860, %v861
    %v863 = vand.u32 %v862, 4294901760
    %864 = vmatpush1.msra.mxu0 %v863
    %865 = vmatprep.subr.mxu0 0.0
    %866 = vmatpush1.msra.mxu0 0.0
    %867 = vmatprep.subr.mxu0 0.0
    %868 = vmatpush1.msra.mxu0 0.0
    %869 = vmatprep.subr.mxu0 0.0
    %870 = vmatpush1.msra.mxu0 0.0
    %871 = vmatprep.subr.mxu0 0.0
    %872 = vmatpush1.msra.mxu0 0.0
    %873 = vmatprep.subr.mxu0 0.0
    %874 = vmatpush1.msra.mxu0 0.0
    %875 = vmatprep.subr.mxu0 0.0
    %876 = vmatpush1.msra.mxu0 0.0
    %877 = vmatprep.subr.mxu0 0.0
    %878 = vmatpush1.msra.mxu0 0.0
    %879 = vmatprep.subr.mxu0 0.0
    %880 = vmatpush1.msra.mxu0 0.0
    %881 = vmatprep.subr.mxu0 0.0
    %882 = vmatpush1.msra.mxu0 0.0
    %883 = vmatprep.subr.mxu0 0.0
    %884 = vmatpush1.msra.mxu0 0.0
    %885 = vmatprep.subr.mxu0 0.0
    %886 = vmatpush1.msra.mxu0 0.0
    %887 = vmatprep.subr.mxu0 0.0
    %888 = vmatpush1.msra.mxu0 0.0
    %889 = vmatprep.subr.mxu0 0.0
    %890 = vmatpush1.msra.mxu0 0.0
    %891 = vmatprep.subr.mxu0 0.0
    %892 = vmatpush1.msra.mxu0 0.0
    %893 = vmatprep.subr.mxu0 0.0
    %894 = vmatpush1.msra.mxu0 0.0
    %895 = vmatprep.subr.mxu0 0.0
    %896 = vmatpush1.msra.mxu0 0.0
    %897 = vmatprep.subr.mxu0 0.0
    %898 = vmatpush1.msra.mxu0 0.0
    %899 = vmatprep.subr.mxu0 0.0
    %900 = vmatpush1.msra.mxu0 0.0
    %901 = vmatprep.subr.mxu0 0.0
    %902 = vmatpush1.msra.mxu0 0.0
    %903 = vmatprep.subr.mxu0 0.0
    %904 = vmatpush1.msra.mxu0 0.0
    %905 = vmatprep.subr.mxu0 0.0
    %906 = vmatpush1.msra.mxu0 0.0
    %907 = vmatprep.subr.mxu0 0.0
    %908 = vmatpush1.msra.mxu0 0.0
    %909 = vmatprep.subr.mxu0 0.0
    %910 = vmatpush1.msra.mxu0 0.0
    %911 = vmatprep.subr.mxu0 0.0
    %912 = vmatpush1.msra.mxu0 0.0
    %913 = vmatprep.subr.mxu0 0.0
    %914 = vmatpush1.msra.mxu0 0.0
    %915 = vmatprep.subr.mxu0 0.0
    %916 = vmatpush1.msra.mxu0 0.0
    %917 = vmatprep.subr.mxu0 0.0
    %918 = vmatpush1.msra.mxu0 0.0
    %919 = vmatprep.subr.mxu0 0.0
    %920 = vmatpush1.msra.mxu0 0.0
    %921 = vmatprep.subr.mxu0 0.0
    %922 = vmatpush1.msra.mxu0 0.0
    %923 = vmatprep.mubr.f32.mxu0 0.0
    %v924 = vand.u32 %v61, 4294901760
    %925 = vmatmul.mubr.f32.gmra.mrb[0].mxu0 %v924
    %v926 = vpop.f32.mrb[0].mxu0
    %v927 = vadd.f32 %v811, %v926
    %v928 = vpop.f32.mrb[0].mxu0
    %929 = vmatprep.mubr.f32.mxu0 0.0
    %v930 = vand.u32 %v64, 4294901760
    %931 = vmatmul.mubr.f32.gmra.mrb[0].mxu0 %v930
    %v932 = vpop.f32.mrb[0].mxu0
    %v933 = vadd.f32 %v821, %v932
    %v934 = vpop.f32.mrb[0].mxu0
    %935 = vmatprep.mubr.f32.mxu0 0.0
    %v936 = vand.u32 %v67, 4294901760
    %937 = vmatmul.mubr.f32.gmra.mrb[0].mxu0 %v936
    %v938 = vpop.f32.mrb[0].mxu0
    %v939 = vadd.f32 %v831, %v938
    %v940 = vpop.f32.mrb[0].mxu0
    %941 = vmatprep.mubr.f32.mxu0 0.0
    %v942 = vand.u32 %v70, 4294901760
    %943 = vmatmul.mubr.f32.gmra.mrb[0].mxu0 %v942
    %v944 = vpop.f32.mrb[0].mxu0
    %v945 = vadd.f32 %v841, %v944
    %v946 = vpop.f32.mrb[0].mxu0
    %947 = vdwg.mxu0
    %948 = vmatprep.subr.mxu0 0.0
    %v949 = vand.u32 %v35, 4294901760
    %v950 = vsub.f32 %v35, %v949
    %951 = vmatpush1.msra.mxu0 %v950
    %952 = vmatprep.subr.mxu0 0.0
    %v953 = vand.u32 %v38, 4294901760
    %v954 = vsub.f32 %v38, %v953
    %955 = vmatpush1.msra.mxu0 %v954
    %956 = vmatprep.subr.mxu0 0.0
    %v957 = vand.u32 %v41, 4294901760
    %v958 = vsub.f32 %v41, %v957
    %959 = vmatpush1.msra.mxu0 %v958
    %960 = vmatprep.subr.mxu0 0.0
    %961 = vmatpush1.msra.mxu0 0.0
    %962 = vmatprep.subr.mxu0 0.0
    %963 = vmatpush1.msra.mxu0 0.0
    %964 = vmatprep.subr.mxu0 0.0
    %965 = vmatpush1.msra.mxu0 0.0
    %966 = vmatprep.subr.mxu0 0.0
    %967 = vmatpush1.msra.mxu0 0.0
    %968 = vmatprep.subr.mxu0 0.0
    %969 = vmatpush1.msra.mxu0 0.0
    %970 = vmatprep.subr.mxu0 0.0
    %971 = vmatpush1.msra.mxu0 0.0
    %972 = vmatprep.subr.mxu0 0.0
    %973 = vmatpush1.msra.mxu0 0.0
    %974 = vmatprep.subr.mxu0 0.0
    %975 = vmatpush1.msra.mxu0 0.0
    %976 = vmatprep.subr.mxu0 0.0
    %977 = vmatpush1.msra.mxu0 0.0
    %978 = vmatprep.subr.mxu0 0.0
    %979 = vmatpush1.msra.mxu0 0.0
    %980 = vmatprep.subr.mxu0 0.0
    %981 = vmatpush1.msra.mxu0 0.0
    %982 = vmatprep.subr.mxu0 0.0
    %983 = vmatpush1.msra.mxu0 0.0
    %984 = vmatprep.subr.mxu0 0.0
    %985 = vmatpush1.msra.mxu0 0.0
    %986 = vmatprep.subr.mxu0 0.0
    %987 = vmatpush1.msra.mxu0 0.0
    %988 = vmatprep.subr.mxu0 0.0
    %989 = vmatpush1.msra.mxu0 0.0
    %990 = vmatprep.subr.mxu0 0.0
    %991 = vmatpush1.msra.mxu0 0.0
    %992 = vmatprep.subr.mxu0 0.0
    %993 = vmatpush1.msra.mxu0 0.0
    %994 = vmatprep.subr.mxu0 0.0
    %995 = vmatpush1.msra.mxu0 0.0
    %996 = vmatprep.subr.mxu0 0.0
    %997 = vmatpush1.msra.mxu0 0.0
    %998 = vmatprep.subr.mxu0 0.0
    %999 = vmatpush1.msra.mxu0 0.0
    %1000 = vmatprep.subr.mxu0 0.0
    %1001 = vmatpush1.msra.mxu0 0.0
    %1002 = vmatprep.subr.mxu0 0.0
    %1003 = vmatpush1.msra.mxu0 0.0
    %1004 = vmatprep.subr.mxu0 0.0
    %1005 = vmatpush1.msra.mxu0 0.0
    %1006 = vmatprep.subr.mxu0 0.0
    %1007 = vmatpush1.msra.mxu0 0.0
    %1008 = vmatprep.subr.mxu0 0.0
    %1009 = vmatpush1.msra.mxu0 0.0
    %1010 = vmatprep.subr.mxu0 0.0
    %1011 = vmatpush1.msra.mxu0 0.0
    %1012 = vmatprep.subr.mxu0 0.0
    %1013 = vmatpush1.msra.mxu0 0.0
    %1014 = vmatprep.subr.mxu0 0.0
    %1015 = vmatpush1.msra.mxu0 0.0
    %1016 = vmatprep.subr.mxu0 0.0
    %1017 = vmatpush1.msra.mxu0 0.0
    %1018 = vmatprep.mubr.f32.mxu0 0.0
    %v1019 = vand.u32 %v61, 4294901760
    %v1020 = vsub.f32 %v61, %v1019
    %1021 = vmatmul.mubr.f32.gmra.mrb[0].mxu0 %v1020
    %v1022 = vpop.f32.mrb[0].mxu0
    %v1023 = vadd.f32 %v927, %v1022
    %v1024 = vpop.f32.mrb[0].mxu0
    %1025 = vmatprep.mubr.f32.mxu0 0.0
    %v1026 = vand.u32 %v64, 4294901760
    %v1027 = vsub.f32 %v64, %v1026
    %1028 = vmatmul.mubr.f32.gmra.mrb[0].mxu0 %v1027
    %v1029 = vpop.f32.mrb[0].mxu0
    %v1030 = vadd.f32 %v933, %v1029
    %v1031 = vpop.f32.mrb[0].mxu0
    %1032 = vmatprep.mubr.f32.mxu0 0.0
    %v1033 = vand.u32 %v67, 4294901760
    %v1034 = vsub.f32 %v67, %v1033
    %1035 = vmatmul.mubr.f32.gmra.mrb[0].mxu0 %v1034
    %v1036 = vpop.f32.mrb[0].mxu0
    %v1037 = vadd.f32 %v939, %v1036
    %v1038 = vpop.f32.mrb[0].mxu0
    %1039 = vmatprep.mubr.f32.mxu0 0.0
    %v1040 = vand.u32 %v70, 4294901760
    %v1041 = vsub.f32 %v70, %v1040
    %1042 = vmatmul.mubr.f32.gmra.mrb[0].mxu0 %v1041
    %v1043 = vpop.f32.mrb[0].mxu0
    %v1044 = vadd.f32 %v945, %v1043
    %v1045 = vpop.f32.mrb[0].mxu0
    %1046 = vdwg.mxu0
    %1047 = vmatprep.subr.mxu0 0.0
    %v1048 = vand.u32 %v35, 4294901760
    %1049 = vmatpush1.msra.mxu0 %v1048
    %1050 = vmatprep.subr.mxu0 0.0
    %v1051 = vand.u32 %v38, 4294901760
    %1052 = vmatpush1.msra.mxu0 %v1051
    %1053 = vmatprep.subr.mxu0 0.0
    %v1054 = vand.u32 %v41, 4294901760
    %1055 = vmatpush1.msra.mxu0 %v1054
    %1056 = vmatprep.subr.mxu0 0.0
    %1057 = vmatpush1.msra.mxu0 0.0
    %1058 = vmatprep.subr.mxu0 0.0
    %1059 = vmatpush1.msra.mxu0 0.0
    %1060 = vmatprep.subr.mxu0 0.0
    %1061 = vmatpush1.msra.mxu0 0.0
    %1062 = vmatprep.subr.mxu0 0.0
    %1063 = vmatpush1.msra.mxu0 0.0
    %1064 = vmatprep.subr.mxu0 0.0
    %1065 = vmatpush1.msra.mxu0 0.0
    %1066 = vmatprep.subr.mxu0 0.0
    %1067 = vmatpush1.msra.mxu0 0.0
    %1068 = vmatprep.subr.mxu0 0.0
    %1069 = vmatpush1.msra.mxu0 0.0
    %1070 = vmatprep.subr.mxu0 0.0
    %1071 = vmatpush1.msra.mxu0 0.0
    %1072 = vmatprep.subr.mxu0 0.0
    %1073 = vmatpush1.msra.mxu0 0.0
    %1074 = vmatprep.subr.mxu0 0.0
    %1075 = vmatpush1.msra.mxu0 0.0
    %1076 = vmatprep.subr.mxu0 0.0
    %1077 = vmatpush1.msra.mxu0 0.0
    %1078 = vmatprep.subr.mxu0 0.0
    %1079 = vmatpush1.msra.mxu0 0.0
    %1080 = vmatprep.subr.mxu0 0.0
    %1081 = vmatpush1.msra.mxu0 0.0
    %1082 = vmatprep.subr.mxu0 0.0
    %1083 = vmatpush1.msra.mxu0 0.0
    %1084 = vmatprep.subr.mxu0 0.0
    %1085 = vmatpush1.msra.mxu0 0.0
    %1086 = vmatprep.subr.mxu0 0.0
    %1087 = vmatpush1.msra.mxu0 0.0
    %1088 = vmatprep.subr.mxu0 0.0
    %1089 = vmatpush1.msra.mxu0 0.0
    %1090 = vmatprep.subr.mxu0 0.0
    %1091 = vmatpush1.msra.mxu0 0.0
    %1092 = vmatprep.subr.mxu0 0.0
    %1093 = vmatpush1.msra.mxu0 0.0
    %1094 = vmatprep.subr.mxu0 0.0
    %1095 = vmatpush1.msra.mxu0 0.0
    %1096 = vmatprep.subr.mxu0 0.0
    %1097 = vmatpush1.msra.mxu0 0.0
    %1098 = vmatprep.subr.mxu0 0.0
    %1099 = vmatpush1.msra.mxu0 0.0
    %1100 = vmatprep.subr.mxu0 0.0
    %1101 = vmatpush1.msra.mxu0 0.0
    %1102 = vmatprep.subr.mxu0 0.0
    %1103 = vmatpush1.msra.mxu0 0.0
    %1104 = vmatprep.subr.mxu0 0.0
    %1105 = vmatpush1.msra.mxu0 0.0
    %1106 = vmatprep.subr.mxu0 0.0
    %1107 = vmatpush1.msra.mxu0 0.0
    %1108 = vmatprep.subr.mxu0 0.0
    %1109 = vmatpush1.msra.mxu0 0.0
    %1110 = vmatprep.subr.mxu0 0.0
    %1111 = vmatpush1.msra.mxu0 0.0
    %1112 = vmatprep.subr.mxu0 0.0
    %1113 = vmatpush1.msra.mxu0 0.0
    %1114 = vmatprep.mubr.f32.mxu0 0.0
    %v1115 = vand.u32 %v61, 4294901760
    %v1116 = vsub.f32 %v61, %v1115
    %v1117 = vand.u32 %v1116, 4294901760
    %1118 = vmatmul.mubr.f32.gmra.mrb[0].mxu0 %v1117
    %v1119 = vpop.f32.mrb[0].mxu0
    %v1120 = vadd.f32 %v1023, %v1119
    %v1121 = vpop.f32.mrb[0].mxu0
    %1122 = vmatprep.mubr.f32.mxu0 0.0
    %v1123 = vand.u32 %v64, 4294901760
    %v1124 = vsub.f32 %v64, %v1123
    %v1125 = vand.u32 %v1124, 4294901760
    %1126 = vmatmul.mubr.f32.gmra.mrb[0].mxu0 %v1125
    %v1127 = vpop.f32.mrb[0].mxu0
    %v1128 = vadd.f32 %v1030, %v1127
    %v1129 = vpop.f32.mrb[0].mxu0
    %1130 = vmatprep.mubr.f32.mxu0 0.0
    %v1131 = vand.u32 %v67, 4294901760
    %v1132 = vsub.f32 %v67, %v1131
    %v1133 = vand.u32 %v1132, 4294901760
    %1134 = vmatmul.mubr.f32.gmra.mrb[0].mxu0 %v1133
    %v1135 = vpop.f32.mrb[0].mxu0
    %v1136 = vadd.f32 %v1037, %v1135
    %v1137 = vpop.f32.mrb[0].mxu0
    %1138 = vmatprep.mubr.f32.mxu0 0.0
    %v1139 = vand.u32 %v70, 4294901760
    %v1140 = vsub.f32 %v70, %v1139
    %v1141 = vand.u32 %v1140, 4294901760
    %1142 = vmatmul.mubr.f32.gmra.mrb[0].mxu0 %v1141
    %v1143 = vpop.f32.mrb[0].mxu0
    %v1144 = vadd.f32 %v1044, %v1143
    %v1145 = vpop.f32.mrb[0].mxu0
    %1146 = vdwg.mxu0
    %1147 = vmatprep.subr.mxu0 0.0
    %v1148 = vand.u32 %v35, 4294901760
    %v1149 = vsub.f32 %v35, %v1148
    %v1150 = vand.u32 %v1149, 4294901760
    %1151 = vmatpush1.msra.mxu0 %v1150
    %1152 = vmatprep.subr.mxu0 0.0
    %v1153 = vand.u32 %v38, 4294901760
    %v1154 = vsub.f32 %v38, %v1153
    %v1155 = vand.u32 %v1154, 4294901760
    %1156 = vmatpush1.msra.mxu0 %v1155
    %1157 = vmatprep.subr.mxu0 0.0
    %v1158 = vand.u32 %v41, 4294901760
    %v1159 = vsub.f32 %v41, %v1158
    %v1160 = vand.u32 %v1159, 4294901760
    %1161 = vmatpush1.msra.mxu0 %v1160
    %1162 = vmatprep.subr.mxu0 0.0
    %1163 = vmatpush1.msra.mxu0 0.0
    %1164 = vmatprep.subr.mxu0 0.0
    %1165 = vmatpush1.msra.mxu0 0.0
    %1166 = vmatprep.subr.mxu0 0.0
    %1167 = vmatpush1.msra.mxu0 0.0
    %1168 = vmatprep.subr.mxu0 0.0
    %1169 = vmatpush1.msra.mxu0 0.0
    %1170 = vmatprep.subr.mxu0 0.0
    %1171 = vmatpush1.msra.mxu0 0.0
    %1172 = vmatprep.subr.mxu0 0.0
    %1173 = vmatpush1.msra.mxu0 0.0
    %1174 = vmatprep.subr.mxu0 0.0
    %1175 = vmatpush1.msra.mxu0 0.0
    %1176 = vmatprep.subr.mxu0 0.0
    %1177 = vmatpush1.msra.mxu0 0.0
    %1178 = vmatprep.subr.mxu0 0.0
    %1179 = vmatpush1.msra.mxu0 0.0
    %1180 = vmatprep.subr.mxu0 0.0
    %1181 = vmatpush1.msra.mxu0 0.0
    %1182 = vmatprep.subr.mxu0 0.0
    %1183 = vmatpush1.msra.mxu0 0.0
    %1184 = vmatprep.subr.mxu0 0.0
    %1185 = vmatpush1.msra.mxu0 0.0
    %1186 = vmatprep.subr.mxu0 0.0
    %1187 = vmatpush1.msra.mxu0 0.0
    %1188 = vmatprep.subr.mxu0 0.0
    %1189 = vmatpush1.msra.mxu0 0.0
    %1190 = vmatprep.subr.mxu0 0.0
    %1191 = vmatpush1.msra.mxu0 0.0
    %1192 = vmatprep.subr.mxu0 0.0
    %1193 = vmatpush1.msra.mxu0 0.0
    %1194 = vmatprep.subr.mxu0 0.0
    %1195 = vmatpush1.msra.mxu0 0.0
    %1196 = vmatprep.subr.mxu0 0.0
    %1197 = vmatpush1.msra.mxu0 0.0
    %1198 = vmatprep.subr.mxu0 0.0
    %1199 = vmatpush1.msra.mxu0 0.0
    %1200 = vmatprep.subr.mxu0 0.0
    %1201 = vmatpush1.msra.mxu0 0.0
    %1202 = vmatprep.subr.mxu0 0.0
    %1203 = vmatpush1.msra.mxu0 0.0
    %1204 = vmatprep.subr.mxu0 0.0
    %1205 = vmatpush1.msra.mxu0 0.0
    %1206 = vmatprep.subr.mxu0 0.0
    %1207 = vmatpush1.msra.mxu0 0.0
    %1208 = vmatprep.subr.mxu0 0.0
    %1209 = vmatpush1.msra.mxu0 0.0
    %1210 = vmatprep.subr.mxu0 0.0
    %1211 = vmatpush1.msra.mxu0 0.0
    %1212 = vmatprep.subr.mxu0 0.0
    %1213 = vmatpush1.msra.mxu0 0.0
    %1214 = vmatprep.subr.mxu0 0.0
    %1215 = vmatpush1.msra.mxu0 0.0
    %1216 = vmatprep.subr.mxu0 0.0
    %1217 = vmatpush1.msra.mxu0 0.0
    %1218 = vmatprep.subr.mxu0 0.0
    %1219 = vmatpush1.msra.mxu0 0.0
    %1220 = vmatprep.mubr.f32.mxu0 0.0
    %v1221 = vand.u32 %v61, 4294901760
    %1222 = vmatmul.mubr.f32.gmra.mrb[0].mxu0 %v1221
    %v1223 = vpop.f32.mrb[0].mxu0
    %v1224 = vadd.f32 %v1120, %v1223
    %v1225 = vpop.f32.mrb[0].mxu0
    %1226 = vmatprep.mubr.f32.mxu0 0.0
    %v1227 = vand.u32 %v64, 4294901760
    %1228 = vmatmul.mubr.f32.gmra.mrb[0].mxu0 %v1227
    %v1229 = vpop.f32.mrb[0].mxu0
    %v1230 = vadd.f32 %v1128, %v1229
    %v1231 = vpop.f32.mrb[0].mxu0
    %1232 = vmatprep.mubr.f32.mxu0 0.0
    %v1233 = vand.u32 %v67, 4294901760
    %1234 = vmatmul.mubr.f32.gmra.mrb[0].mxu0 %v1233
    %v1235 = vpop.f32.mrb[0].mxu0
    %v1236 = vadd.f32 %v1136, %v1235
    %v1237 = vpop.f32.mrb[0].mxu0
    %1238 = vmatprep.mubr.f32.mxu0 0.0
    %v1239 = vand.u32 %v70, 4294901760
    %1240 = vmatmul.mubr.f32.gmra.mrb[0].mxu0 %v1239
    %v1241 = vpop.f32.mrb[0].mxu0
    %v1242 = vadd.f32 %v1144, %v1241
    %v1243 = vpop.f32.mrb[0].mxu0
    %1244 = vdwg.mxu0
    %1245 = vmatprep.subr.mxu0 0.0
    %v1246 = vand.u32 %v35, 4294901760
    %1247 = vmatpush1.msra.mxu0 %v1246
    %1248 = vmatprep.subr.mxu0 0.0
    %v1249 = vand.u32 %v38, 4294901760
    %1250 = vmatpush1.msra.mxu0 %v1249
    %1251 = vmatprep.subr.mxu0 0.0
    %v1252 = vand.u32 %v41, 4294901760
    %1253 = vmatpush1.msra.mxu0 %v1252
    %1254 = vmatprep.subr.mxu0 0.0
    %1255 = vmatpush1.msra.mxu0 0.0
    %1256 = vmatprep.subr.mxu0 0.0
    %1257 = vmatpush1.msra.mxu0 0.0
    %1258 = vmatprep.subr.mxu0 0.0
    %1259 = vmatpush1.msra.mxu0 0.0
    %1260 = vmatprep.subr.mxu0 0.0
    %1261 = vmatpush1.msra.mxu0 0.0
    %1262 = vmatprep.subr.mxu0 0.0
    %1263 = vmatpush1.msra.mxu0 0.0
    %1264 = vmatprep.subr.mxu0 0.0
    %1265 = vmatpush1.msra.mxu0 0.0
    %1266 = vmatprep.subr.mxu0 0.0
    %1267 = vmatpush1.msra.mxu0 0.0
    %1268 = vmatprep.subr.mxu0 0.0
    %1269 = vmatpush1.msra.mxu0 0.0
    %1270 = vmatprep.subr.mxu0 0.0
    %1271 = vmatpush1.msra.mxu0 0.0
    %1272 = vmatprep.subr.mxu0 0.0
    %1273 = vmatpush1.msra.mxu0 0.0
    %1274 = vmatprep.subr.mxu0 0.0
    %1275 = vmatpush1.msra.mxu0 0.0
    %1276 = vmatprep.subr.mxu0 0.0
    %1277 = vmatpush1.msra.mxu0 0.0
    %1278 = vmatprep.subr.mxu0 0.0
    %1279 = vmatpush1.msra.mxu0 0.0
    %1280 = vmatprep.subr.mxu0 0.0
    %1281 = vmatpush1.msra.mxu0 0.0
    %1282 = vmatprep.subr.mxu0 0.0
    %1283 = vmatpush1.msra.mxu0 0.0
    %1284 = vmatprep.subr.mxu0 0.0
    %1285 = vmatpush1.msra.mxu0 0.0
    %1286 = vmatprep.subr.mxu0 0.0
    %1287 = vmatpush1.msra.mxu0 0.0
    %1288 = vmatprep.subr.mxu0 0.0
    %1289 = vmatpush1.msra.mxu0 0.0
    %1290 = vmatprep.subr.mxu0 0.0
    %1291 = vmatpush1.msra.mxu0 0.0
    %1292 = vmatprep.subr.mxu0 0.0
    %1293 = vmatpush1.msra.mxu0 0.0
    %1294 = vmatprep.subr.mxu0 0.0
    %1295 = vmatpush1.msra.mxu0 0.0
    %1296 = vmatprep.subr.mxu0 0.0
    %1297 = vmatpush1.msra.mxu0 0.0
    %1298 = vmatprep.subr.mxu0 0.0
    %1299 = vmatpush1.msra.mxu0 0.0
    %1300 = vmatprep.subr.mxu0 0.0
    %1301 = vmatpush1.msra.mxu0 0.0
    %1302 = vmatprep.subr.mxu0 0.0
    %1303 = vmatpush1.msra.mxu0 0.0
    %1304 = vmatprep.subr.mxu0 0.0
    %1305 = vmatpush1.msra.mxu0 0.0
    %1306 = vmatprep.subr.mxu0 0.0
    %1307 = vmatpush1.msra.mxu0 0.0
    %1308 = vmatprep.subr.mxu0 0.0
    %1309 = vmatpush1.msra.mxu0 0.0
    %1310 = vmatprep.subr.mxu0 0.0
    %1311 = vmatpush1.msra.mxu0 0.0
    %1312 = vmatprep.mubr.f32.mxu0 0.0
    %v1313 = vand.u32 %v61, 4294901760
    %1314 = vmatmul.mubr.f32.gmra.mrb[0].mxu0 %v1313
    %v1315 = vpop.f32.mrb[0].mxu0
    %v1316 = vadd.f32 %v1224, %v1315
    %v1317 = vpop.f32.mrb[0].mxu0
    %1318 = vmatprep.mubr.f32.mxu0 0.0
    %v1319 = vand.u32 %v64, 4294901760
    %1320 = vmatmul.mubr.f32.gmra.mrb[0].mxu0 %v1319
    %v1321 = vpop.f32.mrb[0].mxu0
    %v1322 = vadd.f32 %v1230, %v1321
    %v1323 = vpop.f32.mrb[0].mxu0
    %1324 = vmatprep.mubr.f32.mxu0 0.0
    %v1325 = vand.u32 %v67, 4294901760
    %1326 = vmatmul.mubr.f32.gmra.mrb[0].mxu0 %v1325
    %v1327 = vpop.f32.mrb[0].mxu0
    %v1328 = vadd.f32 %v1236, %v1327
    %v1329 = vpop.f32.mrb[0].mxu0
    %1330 = vmatprep.mubr.f32.mxu0 0.0
    %v1331 = vand.u32 %v70, 4294901760
    %1332 = vmatmul.mubr.f32.gmra.mrb[0].mxu0 %v1331
    %v1333 = vpop.f32.mrb[0].mxu0
    %v1334 = vadd.f32 %v1242, %v1333
    %v1335 = vpop.f32.mrb[0].mxu0
    %1336 = vdwg.mxu0
    %v1337 = vand.u32 2147483647, %v711
    %vm1338 = vcmp.le.f32.partialorder %v1337, 0.7853982
    %vm1339 = vcmp.lt.s32.totalorder %v711, 0
    %v1340 = vand.u32 %v711, 2139095040
    %v1341 = vshrl.u32 %v1340, 23
    %v1342 = vsub.s32 %v1341, 127
    %v1343 = vand.u32 2147483647, %v711
    %v1344 = vand.u32 %v1343, 8388607
    %v1345 = vor.u32 %v1344, 8388608
    %v1346 = vsub.s32 0, %v1345
    %v1347 = vadd.s32 %v1342, 1
    %vm1348 = vcmp.gt.s32.totalorder %v1347, 0
    %v1349 = vsel %vm1348, %v1347, 0
    %v1350 = vshrl.u32 %v1349, 5
    %v1351 = vand.u32 %v1349, 31
    %v1352 = vsub.s32 32, %v1351
    %v1353 = vshrl.u32 683565275, %v1352
    %v1354 = vshll.u32 683565275, %v1351
    %v1355 = vshrl.u32 2475754826, %v1352
    %v1356 = vor.u32 %v1354, %v1355
    %v1357 = vshll.u32 2475754826, %v1351
    %v1358 = vshrl.u32 2131351028, %v1352
    %v1359 = vor.u32 %v1357, %v1358
    %v1360 = vshll.u32 2131351028, %v1351
    %v1361 = vshrl.u32 2102212464, %v1352
    %v1362 = vor.u32 %v1360, %v1361
    %v1363 = vshll.u32 2102212464, %v1351
    %v1364 = vshrl.u32 920167782, %v1352
    %v1365 = vor.u32 %v1363, %v1364
    %v1366 = vshll.u32 920167782, %v1351
    %v1367 = vshrl.u32 1326507024, %v1352
    %v1368 = vor.u32 %v1366, %v1367
    %vm1369 = vcmp.lt.s32.totalorder %v1350, 1
    %vm1370 = vcmp.lt.s32.totalorder %v1350, 2
    %vm1371 = vcmp.lt.s32.totalorder %v1350, 3
    %vm1372 = vcmp.lt.s32.totalorder %v1350, 4
    %v1373 = vsel %vm1369, %v1353, %v1356
    %v1374 = vsel %vm1372, %v1362, 2102212464
    %v1375 = vsel %vm1371, %v1359, %v1374
    %v1376 = vsel %vm1370, %v1373, %v1375
    %v1377 = vsel %vm1369, %v1356, %v1359
    %v1378 = vsel %vm1372, %v1365, 920167782
    %v1379 = vsel %vm1371, %v1362, %v1378
    %v1380 = vsel %vm1370, %v1377, %v1379
    %v1381 = vsel %vm1369, %v1359, %v1362
    %v1382 = vsel %vm1372, %v1368, 1326507024
    %v1383 = vsel %vm1371, %v1365, %v1382
    %v1384 = vsel %vm1370, %v1381, %v1383
    %v1385 = vshll.u32 %v1345, 8
    %v1386 = vmul.u32.u64.compose %v1385, %v1384
    %v1387 = vextract.low.u32 %v1386
    %v1388 = vextract.high.u32 %v1386
    %v1389 = vmul.u32.u64.compose %v1385, %v1380
    %v1390 = vextract.low.u32 %v1389
    %v1391 = vextract.high.u32 %v1389
    %v1392 = vmul.u32 %v1385, %v1376
    %v1393 = vadd.s32 %v1388, %v1390
    %vm1394 = vc.u32 %v1388, %v1390
    %v1395 = vadd.s32 %v1391, 1
    %v1396 = vsel %vm1394, %v1395, %v1391
    %v1397 = vadd.s32 %v1392, %v1396
    %v1398 = vadd.s32 %v1397, 536870912
    %v1399 = vshrl.u32 %v1398, 30
    %v1400 = vshll.u32 %v1399, 30
    %v1401 = vsub.s32 %v1397, %v1400
    %vm1402 = vcmp.lt.s32.totalorder %v1401, 0
    %v1403 = vsub.s32 0, %v1401
    %v1404 = vsel %vm1402, %v1403, %v1401
    %v1405 = vclz %v1404
    %v1406 = vsub.s32 %v1405, 2
    %vm1407 = vcmp.gt.s32.totalorder 0, %v1406
    %v1408 = vsel %vm1407, 0, %v1406
    %v1409 = vsub.s32 32, %v1408
    %v1410 = vshll.u32 %v1401, %v1408
    %v1411 = vshrl.u32 %v1393, %v1409
    %v1412 = vor.u32 %v1410, %v1411
    %v1413 = vsub.s32 4294967266, %v1408
    %v1414 = vadd.s32 %v1413, 127
    %v1415 = vshll.u32 %v1414, 23
    %v1416 = vor.u32 4788187, %v1415
    %v1417 = vand.u32 2147483647, %v1416
    %v1419 = vcvt.s32.f32 %v1412
    %v1420 = vmul.f32 %v1419, %v1417
    %v1421 = vxor.u32 %v1420, 2147483648
    %v1422 = vsel %vm1339, %v1421, %v1420
    %v1423 = vsub.s32 4, %v1399
    %v1424 = vsel %vm1339, %v1423, %v1399
    %v1425 = vsel %vm1338, %v711, %v1422
    %v1426 = vsel %vm1338, 0, %v1424
    %v1427 = vcosq.f32.pop %v1425
    %v1428 = vsinq.f32.pop %v1425
    %vm1429 = vweird.f32 %v711
    %v1430 = vadd.s32 %v1426, 3
    %v1431 = vand.u32 %v1430, 3
    %vm1432 = vcmp.lt.s32.totalorder %v1431, 2
    %vm1433 = vcmp.eq.s32.totalorder %v1431, 0
    %v1434 = vxor.u32 %v1428, 2147483648
    %v1435 = vsel %vm1433, %v1427, %v1434
    %vm1436 = vcmp.eq.s32.totalorder %v1431, 2
    %v1437 = vxor.u32 %v1427, 2147483648
    %v1438 = vsel %vm1436, %v1437, %v1428
    %v1439 = vsel %vm1432, %v1435, %v1438
    %v1440 = vsel %vm1429, nan, %v1439
    %v1441 = vand.u32 2147483647, %v713
    %vm1442 = vcmp.le.f32.partialorder %v1441, 0.7853982
    %vm1443 = vcmp.lt.s32.totalorder %v713, 0
    %v1444 = vand.u32 %v713, 2139095040
    %v1445 = vshrl.u32 %v1444, 23
    %v1446 = vsub.s32 %v1445, 127
    %v1447 = vand.u32 2147483647, %v713
    %v1448 = vand.u32 %v1447, 8388607
    %v1449 = vor.u32 %v1448, 8388608
    %v1450 = vsub.s32 0, %v1449
    %v1451 = vadd.s32 %v1446, 1
    %vm1452 = vcmp.gt.s32.totalorder %v1451, 0
    %v1453 = vsel %vm1452, %v1451, 0
    %v1454 = vshrl.u32 %v1453, 5
    %v1455 = vand.u32 %v1453, 31
    %v1456 = vsub.s32 32, %v1455
    %v1457 = vshrl.u32 683565275, %v1456
    %v1458 = vshll.u32 683565275, %v1455
    %v1459 = vshrl.u32 2475754826, %v1456
    %v1460 = vor.u32 %v1458, %v1459
    %v1461 = vshll.u32 2475754826, %v1455
    %v1462 = vshrl.u32 2131351028, %v1456
    %v1463 = vor.u32 %v1461, %v1462
    %v1464 = vshll.u32 2131351028, %v1455
    %v1465 = vshrl.u32 2102212464, %v1456
    %v1466 = vor.u32 %v1464, %v1465
    %v1467 = vshll.u32 2102212464, %v1455
    %v1468 = vshrl.u32 920167782, %v1456
    %v1469 = vor.u32 %v1467, %v1468
    %v1470 = vshll.u32 920167782, %v1455
    %v1471 = vshrl.u32 1326507024, %v1456
    %v1472 = vor.u32 %v1470, %v1471
    %vm1473 = vcmp.lt.s32.totalorder %v1454, 1
    %vm1474 = vcmp.lt.s32.totalorder %v1454, 2
    %vm1475 = vcmp.lt.s32.totalorder %v1454, 3
    %vm1476 = vcmp.lt.s32.totalorder %v1454, 4
    %v1477 = vsel %vm1473, %v1457, %v1460
    %v1478 = vsel %vm1476, %v1466, 2102212464
    %v1479 = vsel %vm1475, %v1463, %v1478
    %v1480 = vsel %vm1474, %v1477, %v1479
    %v1481 = vsel %vm1473, %v1460, %v1463
    %v1482 = vsel %vm1476, %v1469, 920167782
    %v1483 = vsel %vm1475, %v1466, %v1482
    %v1484 = vsel %vm1474, %v1481, %v1483
    %v1485 = vsel %vm1473, %v1463, %v1466
    %v1486 = vsel %vm1476, %v1472, 1326507024
    %v1487 = vsel %vm1475, %v1469, %v1486
    %v1488 = vsel %vm1474, %v1485, %v1487
    %v1489 = vshll.u32 %v1449, 8
    %v1490 = vmul.u32.u64.compose %v1489, %v1488
    %v1491 = vextract.low.u32 %v1490
    %v1492 = vextract.high.u32 %v1490
    %v1493 = vmul.u32.u64.compose %v1489, %v1484
    %v1494 = vextract.low.u32 %v1493
    %v1495 = vextract.high.u32 %v1493
    %v1496 = vmul.u32 %v1489, %v1480
    %v1497 = vadd.s32 %v1492, %v1494
    %vm1498 = vc.u32 %v1492, %v1494
    %v1499 = vadd.s32 %v1495, 1
    %v1500 = vsel %vm1498, %v1499, %v1495
    %v1501 = vadd.s32 %v1496, %v1500
    %v1502 = vadd.s32 %v1501, 536870912
    %v1503 = vshrl.u32 %v1502, 30
    %v1504 = vshll.u32 %v1503, 30
    %v1505 = vsub.s32 %v1501, %v1504
    %vm1506 = vcmp.lt.s32.totalorder %v1505, 0
    %v1507 = vsub.s32 0, %v1505
    %v1508 = vsel %vm1506, %v1507, %v1505
    %v1509 = vclz %v1508
    %v1510 = vsub.s32 %v1509, 2
    %vm1511 = vcmp.gt.s32.totalorder 0, %v1510
    %v1512 = vsel %vm1511, 0, %v1510
    %v1513 = vsub.s32 32, %v1512
    %v1514 = vshll.u32 %v1505, %v1512
    %v1515 = vshrl.u32 %v1497, %v1513
    %v1516 = vor.u32 %v1514, %v1515
    %v1517 = vsub.s32 4294967266, %v1512
    %v1518 = vadd.s32 %v1517, 127
    %v1519 = vshll.u32 %v1518, 23
    %v1520 = vor.u32 4788187, %v1519
    %v1521 = vand.u32 2147483647, %v1520
    %v1523 = vcvt.s32.f32 %v1516
    %v1524 = vmul.f32 %v1523, %v1521
    %v1525 = vxor.u32 %v1524, 2147483648
    %v1526 = vsel %vm1443, %v1525, %v1524
    %v1527 = vsub.s32 4, %v1503
    %v1528 = vsel %vm1443, %v1527, %v1503
    %v1529 = vsel %vm1442, %v713, %v1526
    %v1530 = vsel %vm1442, 0, %v1528
    %v1531 = vcosq.f32.pop %v1529
    %v1532 = vsinq.f32.pop %v1529
    %vm1533 = vweird.f32 %v713
    %v1534 = vadd.s32 %v1530, 3
    %v1535 = vand.u32 %v1534, 3
    %vm1536 = vcmp.lt.s32.totalorder %v1535, 2
    %vm1537 = vcmp.eq.s32.totalorder %v1535, 0
    %v1538 = vxor.u32 %v1532, 2147483648
    %v1539 = vsel %vm1537, %v1531, %v1538
    %vm1540 = vcmp.eq.s32.totalorder %v1535, 2
    %v1541 = vxor.u32 %v1531, 2147483648
    %v1542 = vsel %vm1540, %v1541, %v1532
    %v1543 = vsel %vm1536, %v1539, %v1542
    %v1544 = vsel %vm1533, nan, %v1543
    %v1545 = vand.u32 2147483647, %v1316
    %vm1546 = vcmp.le.f32.partialorder %v1545, 0.7853982
    %vm1547 = vcmp.lt.s32.totalorder %v1316, 0
    %v1548 = vand.u32 %v1316, 2139095040
    %v1549 = vshrl.u32 %v1548, 23
    %v1550 = vsub.s32 %v1549, 127
    %v1551 = vand.u32 2147483647, %v1316
    %v1552 = vand.u32 %v1551, 8388607
    %v1553 = vor.u32 %v1552, 8388608
    %v1554 = vsub.s32 0, %v1553
    %v1555 = vadd.s32 %v1550, 1
    %vm1556 = vcmp.gt.s32.totalorder %v1555, 0
    %v1557 = vsel %vm1556, %v1555, 0
    %v1558 = vshrl.u32 %v1557, 5
    %v1559 = vand.u32 %v1557, 31
    %v1560 = vsub.s32 32, %v1559
    %v1561 = vshrl.u32 683565275, %v1560
    %v1562 = vshll.u32 683565275, %v1559
    %v1563 = vshrl.u32 2475754826, %v1560
    %v1564 = vor.u32 %v1562, %v1563
    %v1565 = vshll.u32 2475754826, %v1559
    %v1566 = vshrl.u32 2131351028, %v1560
    %v1567 = vor.u32 %v1565, %v1566
    %v1568 = vshll.u32 2131351028, %v1559
    %v1569 = vshrl.u32 2102212464, %v1560
    %v1570 = vor.u32 %v1568, %v1569
    %v1571 = vshll.u32 2102212464, %v1559
    %v1572 = vshrl.u32 920167782, %v1560
    %v1573 = vor.u32 %v1571, %v1572
    %v1574 = vshll.u32 920167782, %v1559
    %v1575 = vshrl.u32 1326507024, %v1560
    %v1576 = vor.u32 %v1574, %v1575
    %vm1577 = vcmp.lt.s32.totalorder %v1558, 1
    %vm1578 = vcmp.lt.s32.totalorder %v1558, 2
    %vm1579 = vcmp.lt.s32.totalorder %v1558, 3
    %vm1580 = vcmp.lt.s32.totalorder %v1558, 4
    %v1581 = vsel %vm1577, %v1561, %v1564
    %v1582 = vsel %vm1580, %v1570, 2102212464
    %v1583 = vsel %vm1579, %v1567, %v1582
    %v1584 = vsel %vm1578, %v1581, %v1583
    %v1585 = vsel %vm1577, %v1564, %v1567
    %v1586 = vsel %vm1580, %v1573, 920167782
    %v1587 = vsel %vm1579, %v1570, %v1586
    %v1588 = vsel %vm1578, %v1585, %v1587
    %v1589 = vsel %vm1577, %v1567, %v1570
    %v1590 = vsel %vm1580, %v1576, 1326507024
    %v1591 = vsel %vm1579, %v1573, %v1590
    %v1592 = vsel %vm1578, %v1589, %v1591
    %v1593 = vshll.u32 %v1553, 8
    %v1594 = vmul.u32.u64.compose %v1593, %v1592
    %v1595 = vextract.low.u32 %v1594
    %v1596 = vextract.high.u32 %v1594
    %v1597 = vmul.u32.u64.compose %v1593, %v1588
    %v1598 = vextract.low.u32 %v1597
    %v1599 = vextract.high.u32 %v1597
    %v1600 = vmul.u32 %v1593, %v1584
    %v1601 = vadd.s32 %v1596, %v1598
    %vm1602 = vc.u32 %v1596, %v1598
    %v1603 = vadd.s32 %v1599, 1
    %v1604 = vsel %vm1602, %v1603, %v1599
    %v1605 = vadd.s32 %v1600, %v1604
    %v1606 = vadd.s32 %v1605, 536870912
    %v1607 = vshrl.u32 %v1606, 30
    %v1608 = vshll.u32 %v1607, 30
    %v1609 = vsub.s32 %v1605, %v1608
    %vm1610 = vcmp.lt.s32.totalorder %v1609, 0
    %v1611 = vsub.s32 0, %v1609
    %v1612 = vsel %vm1610, %v1611, %v1609
    %v1613 = vclz %v1612
    %v1614 = vsub.s32 %v1613, 2
    %vm1615 = vcmp.gt.s32.totalorder 0, %v1614
    %v1616 = vsel %vm1615, 0, %v1614
    %v1617 = vsub.s32 32, %v1616
    %v1618 = vshll.u32 %v1609, %v1616
    %v1619 = vshrl.u32 %v1601, %v1617
    %v1620 = vor.u32 %v1618, %v1619
    %v1621 = vsub.s32 4294967266, %v1616
    %v1622 = vadd.s32 %v1621, 127
    %v1623 = vshll.u32 %v1622, 23
    %v1624 = vor.u32 4788187, %v1623
    %v1625 = vand.u32 2147483647, %v1624
    %v1627 = vcvt.s32.f32 %v1620
    %v1628 = vmul.f32 %v1627, %v1625
    %v1629 = vxor.u32 %v1628, 2147483648
    %v1630 = vsel %vm1547, %v1629, %v1628
    %v1631 = vsub.s32 4, %v1607
    %v1632 = vsel %vm1547, %v1631, %v1607
    %v1633 = vsel %vm1546, %v1316, %v1630
    %v1634 = vsel %vm1546, 0, %v1632
    %v1635 = vcosq.f32.pop %v1633
    %v1636 = vsinq.f32.pop %v1633
    %vm1637 = vweird.f32 %v1316
    %v1638 = vadd.s32 %v1634, 3
    %v1639 = vand.u32 %v1638, 3
    %vm1640 = vcmp.lt.s32.totalorder %v1639, 2
    %vm1641 = vcmp.eq.s32.totalorder %v1639, 0
    %v1642 = vxor.u32 %v1636, 2147483648
    %v1643 = vsel %vm1641, %v1635, %v1642
    %vm1644 = vcmp.eq.s32.totalorder %v1639, 2
    %v1645 = vxor.u32 %v1635, 2147483648
    %v1646 = vsel %vm1644, %v1645, %v1636
    %v1647 = vsel %vm1640, %v1643, %v1646
    %v1648 = vsel %vm1637, nan, %v1647
    %v1649 = vand.u32 2147483647, %v718
    %vm1650 = vcmp.le.f32.partialorder %v1649, 0.7853982
    %vm1651 = vcmp.lt.s32.totalorder %v718, 0
    %v1652 = vand.u32 %v718, 2139095040
    %v1653 = vshrl.u32 %v1652, 23
    %v1654 = vsub.s32 %v1653, 127
    %v1655 = vand.u32 2147483647, %v718
    %v1656 = vand.u32 %v1655, 8388607
    %v1657 = vor.u32 %v1656, 8388608
    %v1658 = vsub.s32 0, %v1657
    %v1659 = vadd.s32 %v1654, 1
    %vm1660 = vcmp.gt.s32.totalorder %v1659, 0
    %v1661 = vsel %vm1660, %v1659, 0
    %v1662 = vshrl.u32 %v1661, 5
    %v1663 = vand.u32 %v1661, 31
    %v1664 = vsub.s32 32, %v1663
    %v1665 = vshrl.u32 683565275, %v1664
    %v1666 = vshll.u32 683565275, %v1663
    %v1667 = vshrl.u32 2475754826, %v1664
    %v1668 = vor.u32 %v1666, %v1667
    %v1669 = vshll.u32 2475754826, %v1663
    %v1670 = vshrl.u32 2131351028, %v1664
    %v1671 = vor.u32 %v1669, %v1670
    %v1672 = vshll.u32 2131351028, %v1663
    %v1673 = vshrl.u32 2102212464, %v1664
    %v1674 = vor.u32 %v1672, %v1673
    %v1675 = vshll.u32 2102212464, %v1663
    %v1676 = vshrl.u32 920167782, %v1664
    %v1677 = vor.u32 %v1675, %v1676
    %v1678 = vshll.u32 920167782, %v1663
    %v1679 = vshrl.u32 1326507024, %v1664
    %v1680 = vor.u32 %v1678, %v1679
    %vm1681 = vcmp.lt.s32.totalorder %v1662, 1
    %vm1682 = vcmp.lt.s32.totalorder %v1662, 2
    %vm1683 = vcmp.lt.s32.totalorder %v1662, 3
    %vm1684 = vcmp.lt.s32.totalorder %v1662, 4
    %v1685 = vsel %vm1681, %v1665, %v1668
    %v1686 = vsel %vm1684, %v1674, 2102212464
    %v1687 = vsel %vm1683, %v1671, %v1686
    %v1688 = vsel %vm1682, %v1685, %v1687
    %v1689 = vsel %vm1681, %v1668, %v1671
    %v1690 = vsel %vm1684, %v1677, 920167782
    %v1691 = vsel %vm1683, %v1674, %v1690
    %v1692 = vsel %vm1682, %v1689, %v1691
    %v1693 = vsel %vm1681, %v1671, %v1674
    %v1694 = vsel %vm1684, %v1680, 1326507024
    %v1695 = vsel %vm1683, %v1677, %v1694
    %v1696 = vsel %vm1682, %v1693, %v1695
    %v1697 = vshll.u32 %v1657, 8
    %v1698 = vmul.u32.u64.compose %v1697, %v1696
    %v1699 = vextract.low.u32 %v1698
    %v1700 = vextract.high.u32 %v1698
    %v1701 = vmul.u32.u64.compose %v1697, %v1692
    %v1702 = vextract.low.u32 %v1701
    %v1703 = vextract.high.u32 %v1701
    %v1704 = vmul.u32 %v1697, %v1688
    %v1705 = vadd.s32 %v1700, %v1702
    %vm1706 = vc.u32 %v1700, %v1702
    %v1707 = vadd.s32 %v1703, 1
    %v1708 = vsel %vm1706, %v1707, %v1703
    %v1709 = vadd.s32 %v1704, %v1708
    %v1710 = vadd.s32 %v1709, 536870912
    %v1711 = vshrl.u32 %v1710, 30
    %v1712 = vshll.u32 %v1711, 30
    %v1713 = vsub.s32 %v1709, %v1712
    %vm1714 = vcmp.lt.s32.totalorder %v1713, 0
    %v1715 = vsub.s32 0, %v1713
    %v1716 = vsel %vm1714, %v1715, %v1713
    %v1717 = vclz %v1716
    %v1718 = vsub.s32 %v1717, 2
    %vm1719 = vcmp.gt.s32.totalorder 0, %v1718
    %v1720 = vsel %vm1719, 0, %v1718
    %v1721 = vsub.s32 32, %v1720
    %v1722 = vshll.u32 %v1713, %v1720
    %v1723 = vshrl.u32 %v1705, %v1721
    %v1724 = vor.u32 %v1722, %v1723
    %v1725 = vsub.s32 4294967266, %v1720
    %v1726 = vadd.s32 %v1725, 127
    %v1727 = vshll.u32 %v1726, 23
    %v1728 = vor.u32 4788187, %v1727
    %v1729 = vand.u32 2147483647, %v1728
    %v1731 = vcvt.s32.f32 %v1724
    %v1732 = vmul.f32 %v1731, %v1729
    %v1733 = vxor.u32 %v1732, 2147483648
    %v1734 = vsel %vm1651, %v1733, %v1732
    %v1735 = vsub.s32 4, %v1711
    %v1736 = vsel %vm1651, %v1735, %v1711
    %v1737 = vsel %vm1650, %v718, %v1734
    %v1738 = vsel %vm1650, 0, %v1736
    %v1739 = vcosq.f32.pop %v1737
    %v1740 = vsinq.f32.pop %v1737
    %vm1741 = vweird.f32 %v718
    %v1742 = vadd.s32 %v1738, 3
    %v1743 = vand.u32 %v1742, 3
    %vm1744 = vcmp.lt.s32.totalorder %v1743, 2
    %vm1745 = vcmp.eq.s32.totalorder %v1743, 0
    %v1746 = vxor.u32 %v1740, 2147483648
    %v1747 = vsel %vm1745, %v1739, %v1746
    %vm1748 = vcmp.eq.s32.totalorder %v1743, 2
    %v1749 = vxor.u32 %v1739, 2147483648
    %v1750 = vsel %vm1748, %v1749, %v1740
    %v1751 = vsel %vm1744, %v1747, %v1750
    %v1752 = vsel %vm1741, nan, %v1751
    %v1753 = vand.u32 2147483647, %v720
    %vm1754 = vcmp.le.f32.partialorder %v1753, 0.7853982
    %vm1755 = vcmp.lt.s32.totalorder %v720, 0
    %v1756 = vand.u32 %v720, 2139095040
    %v1757 = vshrl.u32 %v1756, 23
    %v1758 = vsub.s32 %v1757, 127
    %v1759 = vand.u32 2147483647, %v720
    %v1760 = vand.u32 %v1759, 8388607
    %v1761 = vor.u32 %v1760, 8388608
    %v1762 = vsub.s32 0, %v1761
    %v1763 = vadd.s32 %v1758, 1
    %vm1764 = vcmp.gt.s32.totalorder %v1763, 0
    %v1765 = vsel %vm1764, %v1763, 0
    %v1766 = vshrl.u32 %v1765, 5
    %v1767 = vand.u32 %v1765, 31
    %v1768 = vsub.s32 32, %v1767
    %v1769 = vshrl.u32 683565275, %v1768
    %v1770 = vshll.u32 683565275, %v1767
    %v1771 = vshrl.u32 2475754826, %v1768
    %v1772 = vor.u32 %v1770, %v1771
    %v1773 = vshll.u32 2475754826, %v1767
    %v1774 = vshrl.u32 2131351028, %v1768
    %v1775 = vor.u32 %v1773, %v1774
    %v1776 = vshll.u32 2131351028, %v1767
    %v1777 = vshrl.u32 2102212464, %v1768
    %v1778 = vor.u32 %v1776, %v1777
    %v1779 = vshll.u32 2102212464, %v1767
    %v1780 = vshrl.u32 920167782, %v1768
    %v1781 = vor.u32 %v1779, %v1780
    %v1782 = vshll.u32 920167782, %v1767
    %v1783 = vshrl.u32 1326507024, %v1768
    %v1784 = vor.u32 %v1782, %v1783
    %vm1785 = vcmp.lt.s32.totalorder %v1766, 1
    %vm1786 = vcmp.lt.s32.totalorder %v1766, 2
    %vm1787 = vcmp.lt.s32.totalorder %v1766, 3
    %vm1788 = vcmp.lt.s32.totalorder %v1766, 4
    %v1789 = vsel %vm1785, %v1769, %v1772
    %v1790 = vsel %vm1788, %v1778, 2102212464
    %v1791 = vsel %vm1787, %v1775, %v1790
    %v1792 = vsel %vm1786, %v1789, %v1791
    %v1793 = vsel %vm1785, %v1772, %v1775
    %v1794 = vsel %vm1788, %v1781, 920167782
    %v1795 = vsel %vm1787, %v1778, %v1794
    %v1796 = vsel %vm1786, %v1793, %v1795
    %v1797 = vsel %vm1785, %v1775, %v1778
    %v1798 = vsel %vm1788, %v1784, 1326507024
    %v1799 = vsel %vm1787, %v1781, %v1798
    %v1800 = vsel %vm1786, %v1797, %v1799
    %v1801 = vshll.u32 %v1761, 8
    %v1802 = vmul.u32.u64.compose %v1801, %v1800
    %v1803 = vextract.low.u32 %v1802
    %v1804 = vextract.high.u32 %v1802
    %v1805 = vmul.u32.u64.compose %v1801, %v1796
    %v1806 = vextract.low.u32 %v1805
    %v1807 = vextract.high.u32 %v1805
    %v1808 = vmul.u32 %v1801, %v1792
    %v1809 = vadd.s32 %v1804, %v1806
    %vm1810 = vc.u32 %v1804, %v1806
    %v1811 = vadd.s32 %v1807, 1
    %v1812 = vsel %vm1810, %v1811, %v1807
    %v1813 = vadd.s32 %v1808, %v1812
    %v1814 = vadd.s32 %v1813, 536870912
    %v1815 = vshrl.u32 %v1814, 30
    %v1816 = vshll.u32 %v1815, 30
    %v1817 = vsub.s32 %v1813, %v1816
    %vm1818 = vcmp.lt.s32.totalorder %v1817, 0
    %v1819 = vsub.s32 0, %v1817
    %v1820 = vsel %vm1818, %v1819, %v1817
    %v1821 = vclz %v1820
    %v1822 = vsub.s32 %v1821, 2
    %vm1823 = vcmp.gt.s32.totalorder 0, %v1822
    %v1824 = vsel %vm1823, 0, %v1822
    %v1825 = vsub.s32 32, %v1824
    %v1826 = vshll.u32 %v1817, %v1824
    %v1827 = vshrl.u32 %v1809, %v1825
    %v1828 = vor.u32 %v1826, %v1827
    %v1829 = vsub.s32 4294967266, %v1824
    %v1830 = vadd.s32 %v1829, 127
    %v1831 = vshll.u32 %v1830, 23
    %v1832 = vor.u32 4788187, %v1831
    %v1833 = vand.u32 2147483647, %v1832
    %v1835 = vcvt.s32.f32 %v1828
    %v1836 = vmul.f32 %v1835, %v1833
    %v1837 = vxor.u32 %v1836, 2147483648
    %v1838 = vsel %vm1755, %v1837, %v1836
    %v1839 = vsub.s32 4, %v1815
    %v1840 = vsel %vm1755, %v1839, %v1815
    %v1841 = vsel %vm1754, %v720, %v1838
    %v1842 = vsel %vm1754, 0, %v1840
    %v1843 = vcosq.f32.pop %v1841
    %v1844 = vsinq.f32.pop %v1841
    %vm1845 = vweird.f32 %v720
    %v1846 = vadd.s32 %v1842, 3
    %v1847 = vand.u32 %v1846, 3
    %vm1848 = vcmp.lt.s32.totalorder %v1847, 2
    %vm1849 = vcmp.eq.s32.totalorder %v1847, 0
    %v1850 = vxor.u32 %v1844, 2147483648
    %v1851 = vsel %vm1849, %v1843, %v1850
    %vm1852 = vcmp.eq.s32.totalorder %v1847, 2
    %v1853 = vxor.u32 %v1843, 2147483648
    %v1854 = vsel %vm1852, %v1853, %v1844
    %v1855 = vsel %vm1848, %v1851, %v1854
    %v1856 = vsel %vm1845, nan, %v1855
    %v1857 = vand.u32 2147483647, %v1322
    %vm1858 = vcmp.le.f32.partialorder %v1857, 0.7853982
    %vm1859 = vcmp.lt.s32.totalorder %v1322, 0
    %v1860 = vand.u32 %v1322, 2139095040
    %v1861 = vshrl.u32 %v1860, 23
    %v1862 = vsub.s32 %v1861, 127
    %v1863 = vand.u32 2147483647, %v1322
    %v1864 = vand.u32 %v1863, 8388607
    %v1865 = vor.u32 %v1864, 8388608
    %v1866 = vsub.s32 0, %v1865
    %v1867 = vadd.s32 %v1862, 1
    %vm1868 = vcmp.gt.s32.totalorder %v1867, 0
    %v1869 = vsel %vm1868, %v1867, 0
    %v1870 = vshrl.u32 %v1869, 5
    %v1871 = vand.u32 %v1869, 31
    %v1872 = vsub.s32 32, %v1871
    %v1873 = vshrl.u32 683565275, %v1872
    %v1874 = vshll.u32 683565275, %v1871
    %v1875 = vshrl.u32 2475754826, %v1872
    %v1876 = vor.u32 %v1874, %v1875
    %v1877 = vshll.u32 2475754826, %v1871
    %v1878 = vshrl.u32 2131351028, %v1872
    %v1879 = vor.u32 %v1877, %v1878
    %v1880 = vshll.u32 2131351028, %v1871
    %v1881 = vshrl.u32 2102212464, %v1872
    %v1882 = vor.u32 %v1880, %v1881
    %v1883 = vshll.u32 2102212464, %v1871
    %v1884 = vshrl.u32 920167782, %v1872
    %v1885 = vor.u32 %v1883, %v1884
    %v1886 = vshll.u32 920167782, %v1871
    %v1887 = vshrl.u32 1326507024, %v1872
    %v1888 = vor.u32 %v1886, %v1887
    %vm1889 = vcmp.lt.s32.totalorder %v1870, 1
    %vm1890 = vcmp.lt.s32.totalorder %v1870, 2
    %vm1891 = vcmp.lt.s32.totalorder %v1870, 3
    %vm1892 = vcmp.lt.s32.totalorder %v1870, 4
    %v1893 = vsel %vm1889, %v1873, %v1876
    %v1894 = vsel %vm1892, %v1882, 2102212464
    %v1895 = vsel %vm1891, %v1879, %v1894
    %v1896 = vsel %vm1890, %v1893, %v1895
    %v1897 = vsel %vm1889, %v1876, %v1879
    %v1898 = vsel %vm1892, %v1885, 920167782
    %v1899 = vsel %vm1891, %v1882, %v1898
    %v1900 = vsel %vm1890, %v1897, %v1899
    %v1901 = vsel %vm1889, %v1879, %v1882
    %v1902 = vsel %vm1892, %v1888, 1326507024
    %v1903 = vsel %vm1891, %v1885, %v1902
    %v1904 = vsel %vm1890, %v1901, %v1903
    %v1905 = vshll.u32 %v1865, 8
    %v1906 = vmul.u32.u64.compose %v1905, %v1904
    %v1907 = vextract.low.u32 %v1906
    %v1908 = vextract.high.u32 %v1906
    %v1909 = vmul.u32.u64.compose %v1905, %v1900
    %v1910 = vextract.low.u32 %v1909
    %v1911 = vextract.high.u32 %v1909
    %v1912 = vmul.u32 %v1905, %v1896
    %v1913 = vadd.s32 %v1908, %v1910
    %vm1914 = vc.u32 %v1908, %v1910
    %v1915 = vadd.s32 %v1911, 1
    %v1916 = vsel %vm1914, %v1915, %v1911
    %v1917 = vadd.s32 %v1912, %v1916
    %v1918 = vadd.s32 %v1917, 536870912
    %v1919 = vshrl.u32 %v1918, 30
    %v1920 = vshll.u32 %v1919, 30
    %v1921 = vsub.s32 %v1917, %v1920
    %vm1922 = vcmp.lt.s32.totalorder %v1921, 0
    %v1923 = vsub.s32 0, %v1921
    %v1924 = vsel %vm1922, %v1923, %v1921
    %v1925 = vclz %v1924
    %v1926 = vsub.s32 %v1925, 2
    %vm1927 = vcmp.gt.s32.totalorder 0, %v1926
    %v1928 = vsel %vm1927, 0, %v1926
    %v1929 = vsub.s32 32, %v1928
    %v1930 = vshll.u32 %v1921, %v1928
    %v1931 = vshrl.u32 %v1913, %v1929
    %v1932 = vor.u32 %v1930, %v1931
    %v1933 = vsub.s32 4294967266, %v1928
    %v1934 = vadd.s32 %v1933, 127
    %v1935 = vshll.u32 %v1934, 23
    %v1936 = vor.u32 4788187, %v1935
    %v1937 = vand.u32 2147483647, %v1936
    %v1939 = vcvt.s32.f32 %v1932
    %v1940 = vmul.f32 %v1939, %v1937
    %v1941 = vxor.u32 %v1940, 2147483648
    %v1942 = vsel %vm1859, %v1941, %v1940
    %v1943 = vsub.s32 4, %v1919
    %v1944 = vsel %vm1859, %v1943, %v1919
    %v1945 = vsel %vm1858, %v1322, %v1942
    %v1946 = vsel %vm1858, 0, %v1944
    %v1947 = vcosq.f32.pop %v1945
    %v1948 = vsinq.f32.pop %v1945
    %vm1949 = vweird.f32 %v1322
    %v1950 = vadd.s32 %v1946, 3
    %v1951 = vand.u32 %v1950, 3
    %vm1952 = vcmp.lt.s32.totalorder %v1951, 2
    %vm1953 = vcmp.eq.s32.totalorder %v1951, 0
    %v1954 = vxor.u32 %v1948, 2147483648
    %v1955 = vsel %vm1953, %v1947, %v1954
    %vm1956 = vcmp.eq.s32.totalorder %v1951, 2
    %v1957 = vxor.u32 %v1947, 2147483648
    %v1958 = vsel %vm1956, %v1957, %v1948
    %v1959 = vsel %vm1952, %v1955, %v1958
    %v1960 = vsel %vm1949, nan, %v1959
    %v1961 = vand.u32 2147483647, %v725
    %vm1962 = vcmp.le.f32.partialorder %v1961, 0.7853982
    %vm1963 = vcmp.lt.s32.totalorder %v725, 0
    %v1964 = vand.u32 %v725, 2139095040
    %v1965 = vshrl.u32 %v1964, 23
    %v1966 = vsub.s32 %v1965, 127
    %v1967 = vand.u32 2147483647, %v725
    %v1968 = vand.u32 %v1967, 8388607
    %v1969 = vor.u32 %v1968, 8388608
    %v1970 = vsub.s32 0, %v1969
    %v1971 = vadd.s32 %v1966, 1
    %vm1972 = vcmp.gt.s32.totalorder %v1971, 0
    %v1973 = vsel %vm1972, %v1971, 0
    %v1974 = vshrl.u32 %v1973, 5
    %v1975 = vand.u32 %v1973, 31
    %v1976 = vsub.s32 32, %v1975
    %v1977 = vshrl.u32 683565275, %v1976
    %v1978 = vshll.u32 683565275, %v1975
    %v1979 = vshrl.u32 2475754826, %v1976
    %v1980 = vor.u32 %v1978, %v1979
    %v1981 = vshll.u32 2475754826, %v1975
    %v1982 = vshrl.u32 2131351028, %v1976
    %v1983 = vor.u32 %v1981, %v1982
    %v1984 = vshll.u32 2131351028, %v1975
    %v1985 = vshrl.u32 2102212464, %v1976
    %v1986 = vor.u32 %v1984, %v1985
    %v1987 = vshll.u32 2102212464, %v1975
    %v1988 = vshrl.u32 920167782, %v1976
    %v1989 = vor.u32 %v1987, %v1988
    %v1990 = vshll.u32 920167782, %v1975
    %v1991 = vshrl.u32 1326507024, %v1976
    %v1992 = vor.u32 %v1990, %v1991
    %vm1993 = vcmp.lt.s32.totalorder %v1974, 1
    %vm1994 = vcmp.lt.s32.totalorder %v1974, 2
    %vm1995 = vcmp.lt.s32.totalorder %v1974, 3
    %vm1996 = vcmp.lt.s32.totalorder %v1974, 4
    %v1997 = vsel %vm1993, %v1977, %v1980
    %v1998 = vsel %vm1996, %v1986, 2102212464
    %v1999 = vsel %vm1995, %v1983, %v1998
    %v2000 = vsel %vm1994, %v1997, %v1999
    %v2001 = vsel %vm1993, %v1980, %v1983
    %v2002 = vsel %vm1996, %v1989, 920167782
    %v2003 = vsel %vm1995, %v1986, %v2002
    %v2004 = vsel %vm1994, %v2001, %v2003
    %v2005 = vsel %vm1993, %v1983, %v1986
    %v2006 = vsel %vm1996, %v1992, 1326507024
    %v2007 = vsel %vm1995, %v1989, %v2006
    %v2008 = vsel %vm1994, %v2005, %v2007
    %v2009 = vshll.u32 %v1969, 8
    %v2010 = vmul.u32.u64.compose %v2009, %v2008
    %v2011 = vextract.low.u32 %v2010
    %v2012 = vextract.high.u32 %v2010
    %v2013 = vmul.u32.u64.compose %v2009, %v2004
    %v2014 = vextract.low.u32 %v2013
    %v2015 = vextract.high.u32 %v2013
    %v2016 = vmul.u32 %v2009, %v2000
    %v2017 = vadd.s32 %v2012, %v2014
    %vm2018 = vc.u32 %v2012, %v2014
    %v2019 = vadd.s32 %v2015, 1
    %v2020 = vsel %vm2018, %v2019, %v2015
    %v2021 = vadd.s32 %v2016, %v2020
    %v2022 = vadd.s32 %v2021, 536870912
    %v2023 = vshrl.u32 %v2022, 30
    %v2024 = vshll.u32 %v2023, 30
    %v2025 = vsub.s32 %v2021, %v2024
    %vm2026 = vcmp.lt.s32.totalorder %v2025, 0
    %v2027 = vsub.s32 0, %v2025
    %v2028 = vsel %vm2026, %v2027, %v2025
    %v2029 = vclz %v2028
    %v2030 = vsub.s32 %v2029, 2
    %vm2031 = vcmp.gt.s32.totalorder 0, %v2030
    %v2032 = vsel %vm2031, 0, %v2030
    %v2033 = vsub.s32 32, %v2032
    %v2034 = vshll.u32 %v2025, %v2032
    %v2035 = vshrl.u32 %v2017, %v2033
    %v2036 = vor.u32 %v2034, %v2035
    %v2037 = vsub.s32 4294967266, %v2032
    %v2038 = vadd.s32 %v2037, 127
    %v2039 = vshll.u32 %v2038, 23
    %v2040 = vor.u32 4788187, %v2039
    %v2041 = vand.u32 2147483647, %v2040
    %v2043 = vcvt.s32.f32 %v2036
    %v2044 = vmul.f32 %v2043, %v2041
    %v2045 = vxor.u32 %v2044, 2147483648
    %v2046 = vsel %vm1963, %v2045, %v2044
    %v2047 = vsub.s32 4, %v2023
    %v2048 = vsel %vm1963, %v2047, %v2023
    %v2049 = vsel %vm1962, %v725, %v2046
    %v2050 = vsel %vm1962, 0, %v2048
    %v2051 = vcosq.f32.pop %v2049
    %v2052 = vsinq.f32.pop %v2049
    %vm2053 = vweird.f32 %v725
    %v2054 = vadd.s32 %v2050, 3
    %v2055 = vand.u32 %v2054, 3
    %vm2056 = vcmp.lt.s32.totalorder %v2055, 2
    %vm2057 = vcmp.eq.s32.totalorder %v2055, 0
    %v2058 = vxor.u32 %v2052, 2147483648
    %v2059 = vsel %vm2057, %v2051, %v2058
    %vm2060 = vcmp.eq.s32.totalorder %v2055, 2
    %v2061 = vxor.u32 %v2051, 2147483648
    %v2062 = vsel %vm2060, %v2061, %v2052
    %v2063 = vsel %vm2056, %v2059, %v2062
    %v2064 = vsel %vm2053, nan, %v2063
    %v2065 = vand.u32 2147483647, %v727
    %vm2066 = vcmp.le.f32.partialorder %v2065, 0.7853982
    %vm2067 = vcmp.lt.s32.totalorder %v727, 0
    %v2068 = vand.u32 %v727, 2139095040
    %v2069 = vshrl.u32 %v2068, 23
    %v2070 = vsub.s32 %v2069, 127
    %v2071 = vand.u32 2147483647, %v727
    %v2072 = vand.u32 %v2071, 8388607
    %v2073 = vor.u32 %v2072, 8388608
    %v2074 = vsub.s32 0, %v2073
    %v2075 = vadd.s32 %v2070, 1
    %vm2076 = vcmp.gt.s32.totalorder %v2075, 0
    %v2077 = vsel %vm2076, %v2075, 0
    %v2078 = vshrl.u32 %v2077, 5
    %v2079 = vand.u32 %v2077, 31
    %v2080 = vsub.s32 32, %v2079
    %v2081 = vshrl.u32 683565275, %v2080
    %v2082 = vshll.u32 683565275, %v2079
    %v2083 = vshrl.u32 2475754826, %v2080
    %v2084 = vor.u32 %v2082, %v2083
    %v2085 = vshll.u32 2475754826, %v2079
    %v2086 = vshrl.u32 2131351028, %v2080
    %v2087 = vor.u32 %v2085, %v2086
    %v2088 = vshll.u32 2131351028, %v2079
    %v2089 = vshrl.u32 2102212464, %v2080
    %v2090 = vor.u32 %v2088, %v2089
    %v2091 = vshll.u32 2102212464, %v2079
    %v2092 = vshrl.u32 920167782, %v2080
    %v2093 = vor.u32 %v2091, %v2092
    %v2094 = vshll.u32 920167782, %v2079
    %v2095 = vshrl.u32 1326507024, %v2080
    %v2096 = vor.u32 %v2094, %v2095
    %vm2097 = vcmp.lt.s32.totalorder %v2078, 1
    %vm2098 = vcmp.lt.s32.totalorder %v2078, 2
    %vm2099 = vcmp.lt.s32.totalorder %v2078, 3
    %vm2100 = vcmp.lt.s32.totalorder %v2078, 4
    %v2101 = vsel %vm2097, %v2081, %v2084
    %v2102 = vsel %vm2100, %v2090, 2102212464
    %v2103 = vsel %vm2099, %v2087, %v2102
    %v2104 = vsel %vm2098, %v2101, %v2103
    %v2105 = vsel %vm2097, %v2084, %v2087
    %v2106 = vsel %vm2100, %v2093, 920167782
    %v2107 = vsel %vm2099, %v2090, %v2106
    %v2108 = vsel %vm2098, %v2105, %v2107
    %v2109 = vsel %vm2097, %v2087, %v2090
    %v2110 = vsel %vm2100, %v2096, 1326507024
    %v2111 = vsel %vm2099, %v2093, %v2110
    %v2112 = vsel %vm2098, %v2109, %v2111
    %v2113 = vshll.u32 %v2073, 8
    %v2114 = vmul.u32.u64.compose %v2113, %v2112
    %v2115 = vextract.low.u32 %v2114
    %v2116 = vextract.high.u32 %v2114
    %v2117 = vmul.u32.u64.compose %v2113, %v2108
    %v2118 = vextract.low.u32 %v2117
    %v2119 = vextract.high.u32 %v2117
    %v2120 = vmul.u32 %v2113, %v2104
    %v2121 = vadd.s32 %v2116, %v2118
    %vm2122 = vc.u32 %v2116, %v2118
    %v2123 = vadd.s32 %v2119, 1
    %v2124 = vsel %vm2122, %v2123, %v2119
    %v2125 = vadd.s32 %v2120, %v2124
    %v2126 = vadd.s32 %v2125, 536870912
    %v2127 = vshrl.u32 %v2126, 30
    %v2128 = vshll.u32 %v2127, 30
    %v2129 = vsub.s32 %v2125, %v2128
    %vm2130 = vcmp.lt.s32.totalorder %v2129, 0
    %v2131 = vsub.s32 0, %v2129
    %v2132 = vsel %vm2130, %v2131, %v2129
    %v2133 = vclz %v2132
    %v2134 = vsub.s32 %v2133, 2
    %vm2135 = vcmp.gt.s32.totalorder 0, %v2134
    %v2136 = vsel %vm2135, 0, %v2134
    %v2137 = vsub.s32 32, %v2136
    %v2138 = vshll.u32 %v2129, %v2136
    %v2139 = vshrl.u32 %v2121, %v2137
    %v2140 = vor.u32 %v2138, %v2139
    %v2141 = vsub.s32 4294967266, %v2136
    %v2142 = vadd.s32 %v2141, 127
    %v2143 = vshll.u32 %v2142, 23
    %v2144 = vor.u32 4788187, %v2143
    %v2145 = vand.u32 2147483647, %v2144
    %v2147 = vcvt.s32.f32 %v2140
    %v2148 = vmul.f32 %v2147, %v2145
    %v2149 = vxor.u32 %v2148, 2147483648
    %v2150 = vsel %vm2067, %v2149, %v2148
    %v2151 = vsub.s32 4, %v2127
    %v2152 = vsel %vm2067, %v2151, %v2127
    %v2153 = vsel %vm2066, %v727, %v2150
    %v2154 = vsel %vm2066, 0, %v2152
    %v2155 = vcosq.f32.pop %v2153
    %v2156 = vsinq.f32.pop %v2153
    %vm2157 = vweird.f32 %v727
    %v2158 = vadd.s32 %v2154, 3
    %v2159 = vand.u32 %v2158, 3
    %vm2160 = vcmp.lt.s32.totalorder %v2159, 2
    %vm2161 = vcmp.eq.s32.totalorder %v2159, 0
    %v2162 = vxor.u32 %v2156, 2147483648
    %v2163 = vsel %vm2161, %v2155, %v2162
    %vm2164 = vcmp.eq.s32.totalorder %v2159, 2
    %v2165 = vxor.u32 %v2155, 2147483648
    %v2166 = vsel %vm2164, %v2165, %v2156
    %v2167 = vsel %vm2160, %v2163, %v2166
    %v2168 = vsel %vm2157, nan, %v2167
    %v2169 = vand.u32 2147483647, %v1328
    %vm2170 = vcmp.le.f32.partialorder %v2169, 0.7853982
    %vm2171 = vcmp.lt.s32.totalorder %v1328, 0
    %v2172 = vand.u32 %v1328, 2139095040
    %v2173 = vshrl.u32 %v2172, 23
    %v2174 = vsub.s32 %v2173, 127
    %v2175 = vand.u32 2147483647, %v1328
    %v2176 = vand.u32 %v2175, 8388607
    %v2177 = vor.u32 %v2176, 8388608
    %v2178 = vsub.s32 0, %v2177
    %v2179 = vadd.s32 %v2174, 1
    %vm2180 = vcmp.gt.s32.totalorder %v2179, 0
    %v2181 = vsel %vm2180, %v2179, 0
    %v2182 = vshrl.u32 %v2181, 5
    %v2183 = vand.u32 %v2181, 31
    %v2184 = vsub.s32 32, %v2183
    %v2185 = vshrl.u32 683565275, %v2184
    %v2186 = vshll.u32 683565275, %v2183
    %v2187 = vshrl.u32 2475754826, %v2184
    %v2188 = vor.u32 %v2186, %v2187
    %v2189 = vshll.u32 2475754826, %v2183
    %v2190 = vshrl.u32 2131351028, %v2184
    %v2191 = vor.u32 %v2189, %v2190
    %v2192 = vshll.u32 2131351028, %v2183
    %v2193 = vshrl.u32 2102212464, %v2184
    %v2194 = vor.u32 %v2192, %v2193
    %v2195 = vshll.u32 2102212464, %v2183
    %v2196 = vshrl.u32 920167782, %v2184
    %v2197 = vor.u32 %v2195, %v2196
    %v2198 = vshll.u32 920167782, %v2183
    %v2199 = vshrl.u32 1326507024, %v2184
    %v2200 = vor.u32 %v2198, %v2199
    %vm2201 = vcmp.lt.s32.totalorder %v2182, 1
    %vm2202 = vcmp.lt.s32.totalorder %v2182, 2
    %vm2203 = vcmp.lt.s32.totalorder %v2182, 3
    %vm2204 = vcmp.lt.s32.totalorder %v2182, 4
    %v2205 = vsel %vm2201, %v2185, %v2188
    %v2206 = vsel %vm2204, %v2194, 2102212464
    %v2207 = vsel %vm2203, %v2191, %v2206
    %v2208 = vsel %vm2202, %v2205, %v2207
    %v2209 = vsel %vm2201, %v2188, %v2191
    %v2210 = vsel %vm2204, %v2197, 920167782
    %v2211 = vsel %vm2203, %v2194, %v2210
    %v2212 = vsel %vm2202, %v2209, %v2211
    %v2213 = vsel %vm2201, %v2191, %v2194
    %v2214 = vsel %vm2204, %v2200, 1326507024
    %v2215 = vsel %vm2203, %v2197, %v2214
    %v2216 = vsel %vm2202, %v2213, %v2215
    %v2217 = vshll.u32 %v2177, 8
    %v2218 = vmul.u32.u64.compose %v2217, %v2216
    %v2219 = vextract.low.u32 %v2218
    %v2220 = vextract.high.u32 %v2218
    %v2221 = vmul.u32.u64.compose %v2217, %v2212
    %v2222 = vextract.low.u32 %v2221
    %v2223 = vextract.high.u32 %v2221
    %v2224 = vmul.u32 %v2217, %v2208
    %v2225 = vadd.s32 %v2220, %v2222
    %vm2226 = vc.u32 %v2220, %v2222
    %v2227 = vadd.s32 %v2223, 1
    %v2228 = vsel %vm2226, %v2227, %v2223
    %v2229 = vadd.s32 %v2224, %v2228
    %v2230 = vadd.s32 %v2229, 536870912
    %v2231 = vshrl.u32 %v2230, 30
    %v2232 = vshll.u32 %v2231, 30
    %v2233 = vsub.s32 %v2229, %v2232
    %vm2234 = vcmp.lt.s32.totalorder %v2233, 0
    %v2235 = vsub.s32 0, %v2233
    %v2236 = vsel %vm2234, %v2235, %v2233
    %v2237 = vclz %v2236
    %v2238 = vsub.s32 %v2237, 2
    %vm2239 = vcmp.gt.s32.totalorder 0, %v2238
    %v2240 = vsel %vm2239, 0, %v2238
    %v2241 = vsub.s32 32, %v2240
    %v2242 = vshll.u32 %v2233, %v2240
    %v2243 = vshrl.u32 %v2225, %v2241
    %v2244 = vor.u32 %v2242, %v2243
    %v2245 = vsub.s32 4294967266, %v2240
    %v2246 = vadd.s32 %v2245, 127
    %v2247 = vshll.u32 %v2246, 23
    %v2248 = vor.u32 4788187, %v2247
    %v2249 = vand.u32 2147483647, %v2248
    %v2251 = vcvt.s32.f32 %v2244
    %v2252 = vmul.f32 %v2251, %v2249
    %v2253 = vxor.u32 %v2252, 2147483648
    %v2254 = vsel %vm2171, %v2253, %v2252
    %v2255 = vsub.s32 4, %v2231
    %v2256 = vsel %vm2171, %v2255, %v2231
    %v2257 = vsel %vm2170, %v1328, %v2254
    %v2258 = vsel %vm2170, 0, %v2256
    %v2259 = vcosq.f32.pop %v2257
    %v2260 = vsinq.f32.pop %v2257
    %vm2261 = vweird.f32 %v1328
    %v2262 = vadd.s32 %v2258, 3
    %v2263 = vand.u32 %v2262, 3
    %vm2264 = vcmp.lt.s32.totalorder %v2263, 2
    %vm2265 = vcmp.eq.s32.totalorder %v2263, 0
    %v2266 = vxor.u32 %v2260, 2147483648
    %v2267 = vsel %vm2265, %v2259, %v2266
    %vm2268 = vcmp.eq.s32.totalorder %v2263, 2
    %v2269 = vxor.u32 %v2259, 2147483648
    %v2270 = vsel %vm2268, %v2269, %v2260
    %v2271 = vsel %vm2264, %v2267, %v2270
    %v2272 = vsel %vm2261, nan, %v2271
    %v2273 = vand.u32 2147483647, %v732
    %vm2274 = vcmp.le.f32.partialorder %v2273, 0.7853982
    %vm2275 = vcmp.lt.s32.totalorder %v732, 0
    %v2276 = vand.u32 %v732, 2139095040
    %v2277 = vshrl.u32 %v2276, 23
    %v2278 = vsub.s32 %v2277, 127
    %v2279 = vand.u32 2147483647, %v732
    %v2280 = vand.u32 %v2279, 8388607
    %v2281 = vor.u32 %v2280, 8388608
    %v2282 = vsub.s32 0, %v2281
    %v2283 = vadd.s32 %v2278, 1
    %vm2284 = vcmp.gt.s32.totalorder %v2283, 0
    %v2285 = vsel %vm2284, %v2283, 0
    %v2286 = vshrl.u32 %v2285, 5
    %v2287 = vand.u32 %v2285, 31
    %v2288 = vsub.s32 32, %v2287
    %v2289 = vshrl.u32 683565275, %v2288
    %v2290 = vshll.u32 683565275, %v2287
    %v2291 = vshrl.u32 2475754826, %v2288
    %v2292 = vor.u32 %v2290, %v2291
    %v2293 = vshll.u32 2475754826, %v2287
    %v2294 = vshrl.u32 2131351028, %v2288
    %v2295 = vor.u32 %v2293, %v2294
    %v2296 = vshll.u32 2131351028, %v2287
    %v2297 = vshrl.u32 2102212464, %v2288
    %v2298 = vor.u32 %v2296, %v2297
    %v2299 = vshll.u32 2102212464, %v2287
    %v2300 = vshrl.u32 920167782, %v2288
    %v2301 = vor.u32 %v2299, %v2300
    %v2302 = vshll.u32 920167782, %v2287
    %v2303 = vshrl.u32 1326507024, %v2288
    %v2304 = vor.u32 %v2302, %v2303
    %vm2305 = vcmp.lt.s32.totalorder %v2286, 1
    %vm2306 = vcmp.lt.s32.totalorder %v2286, 2
    %vm2307 = vcmp.lt.s32.totalorder %v2286, 3
    %vm2308 = vcmp.lt.s32.totalorder %v2286, 4
    %v2309 = vsel %vm2305, %v2289, %v2292
    %v2310 = vsel %vm2308, %v2298, 2102212464
    %v2311 = vsel %vm2307, %v2295, %v2310
    %v2312 = vsel %vm2306, %v2309, %v2311
    %v2313 = vsel %vm2305, %v2292, %v2295
    %v2314 = vsel %vm2308, %v2301, 920167782
    %v2315 = vsel %vm2307, %v2298, %v2314
    %v2316 = vsel %vm2306, %v2313, %v2315
    %v2317 = vsel %vm2305, %v2295, %v2298
    %v2318 = vsel %vm2308, %v2304, 1326507024
    %v2319 = vsel %vm2307, %v2301, %v2318
    %v2320 = vsel %vm2306, %v2317, %v2319
    %v2321 = vshll.u32 %v2281, 8
    %v2322 = vmul.u32.u64.compose %v2321, %v2320
    %v2323 = vextract.low.u32 %v2322
    %v2324 = vextract.high.u32 %v2322
    %v2325 = vmul.u32.u64.compose %v2321, %v2316
    %v2326 = vextract.low.u32 %v2325
    %v2327 = vextract.high.u32 %v2325
    %v2328 = vmul.u32 %v2321, %v2312
    %v2329 = vadd.s32 %v2324, %v2326
    %vm2330 = vc.u32 %v2324, %v2326
    %v2331 = vadd.s32 %v2327, 1
    %v2332 = vsel %vm2330, %v2331, %v2327
    %v2333 = vadd.s32 %v2328, %v2332
    %v2334 = vadd.s32 %v2333, 536870912
    %v2335 = vshrl.u32 %v2334, 30
    %v2336 = vshll.u32 %v2335, 30
    %v2337 = vsub.s32 %v2333, %v2336
    %vm2338 = vcmp.lt.s32.totalorder %v2337, 0
    %v2339 = vsub.s32 0, %v2337
    %v2340 = vsel %vm2338, %v2339, %v2337
    %v2341 = vclz %v2340
    %v2342 = vsub.s32 %v2341, 2
    %vm2343 = vcmp.gt.s32.totalorder 0, %v2342
    %v2344 = vsel %vm2343, 0, %v2342
    %v2345 = vsub.s32 32, %v2344
    %v2346 = vshll.u32 %v2337, %v2344
    %v2347 = vshrl.u32 %v2329, %v2345
    %v2348 = vor.u32 %v2346, %v2347
    %v2349 = vsub.s32 4294967266, %v2344
    %v2350 = vadd.s32 %v2349, 127
    %v2351 = vshll.u32 %v2350, 23
    %v2352 = vor.u32 4788187, %v2351
    %v2353 = vand.u32 2147483647, %v2352
    %v2355 = vcvt.s32.f32 %v2348
    %v2356 = vmul.f32 %v2355, %v2353
    %v2357 = vxor.u32 %v2356, 2147483648
    %v2358 = vsel %vm2275, %v2357, %v2356
    %v2359 = vsub.s32 4, %v2335
    %v2360 = vsel %vm2275, %v2359, %v2335
    %v2361 = vsel %vm2274, %v732, %v2358
    %v2362 = vsel %vm2274, 0, %v2360
    %v2363 = vcosq.f32.pop %v2361
    %v2364 = vsinq.f32.pop %v2361
    %vm2365 = vweird.f32 %v732
    %v2366 = vadd.s32 %v2362, 3
    %v2367 = vand.u32 %v2366, 3
    %vm2368 = vcmp.lt.s32.totalorder %v2367, 2
    %vm2369 = vcmp.eq.s32.totalorder %v2367, 0
    %v2370 = vxor.u32 %v2364, 2147483648
    %v2371 = vsel %vm2369, %v2363, %v2370
    %vm2372 = vcmp.eq.s32.totalorder %v2367, 2
    %v2373 = vxor.u32 %v2363, 2147483648
    %v2374 = vsel %vm2372, %v2373, %v2364
    %v2375 = vsel %vm2368, %v2371, %v2374
    %v2376 = vsel %vm2365, nan, %v2375
    %v2377 = vand.u32 2147483647, %v734
    %vm2378 = vcmp.le.f32.partialorder %v2377, 0.7853982
    %vm2379 = vcmp.lt.s32.totalorder %v734, 0
    %v2380 = vand.u32 %v734, 2139095040
    %v2381 = vshrl.u32 %v2380, 23
    %v2382 = vsub.s32 %v2381, 127
    %v2383 = vand.u32 2147483647, %v734
    %v2384 = vand.u32 %v2383, 8388607
    %v2385 = vor.u32 %v2384, 8388608
    %v2386 = vsub.s32 0, %v2385
    %v2387 = vadd.s32 %v2382, 1
    %vm2388 = vcmp.gt.s32.totalorder %v2387, 0
    %v2389 = vsel %vm2388, %v2387, 0
    %v2390 = vshrl.u32 %v2389, 5
    %v2391 = vand.u32 %v2389, 31
    %v2392 = vsub.s32 32, %v2391
    %v2393 = vshrl.u32 683565275, %v2392
    %v2394 = vshll.u32 683565275, %v2391
    %v2395 = vshrl.u32 2475754826, %v2392
    %v2396 = vor.u32 %v2394, %v2395
    %v2397 = vshll.u32 2475754826, %v2391
    %v2398 = vshrl.u32 2131351028, %v2392
    %v2399 = vor.u32 %v2397, %v2398
    %v2400 = vshll.u32 2131351028, %v2391
    %v2401 = vshrl.u32 2102212464, %v2392
    %v2402 = vor.u32 %v2400, %v2401
    %v2403 = vshll.u32 2102212464, %v2391
    %v2404 = vshrl.u32 920167782, %v2392
    %v2405 = vor.u32 %v2403, %v2404
    %v2406 = vshll.u32 920167782, %v2391
    %v2407 = vshrl.u32 1326507024, %v2392
    %v2408 = vor.u32 %v2406, %v2407
    %vm2409 = vcmp.lt.s32.totalorder %v2390, 1
    %vm2410 = vcmp.lt.s32.totalorder %v2390, 2
    %vm2411 = vcmp.lt.s32.totalorder %v2390, 3
    %vm2412 = vcmp.lt.s32.totalorder %v2390, 4
    %v2413 = vsel %vm2409, %v2393, %v2396
    %v2414 = vsel %vm2412, %v2402, 2102212464
    %v2415 = vsel %vm2411, %v2399, %v2414
    %v2416 = vsel %vm2410, %v2413, %v2415
    %v2417 = vsel %vm2409, %v2396, %v2399
    %v2418 = vsel %vm2412, %v2405, 920167782
    %v2419 = vsel %vm2411, %v2402, %v2418
    %v2420 = vsel %vm2410, %v2417, %v2419
    %v2421 = vsel %vm2409, %v2399, %v2402
    %v2422 = vsel %vm2412, %v2408, 1326507024
    %v2423 = vsel %vm2411, %v2405, %v2422
    %v2424 = vsel %vm2410, %v2421, %v2423
    %v2425 = vshll.u32 %v2385, 8
    %v2426 = vmul.u32.u64.compose %v2425, %v2424
    %v2427 = vextract.low.u32 %v2426
    %v2428 = vextract.high.u32 %v2426
    %v2429 = vmul.u32.u64.compose %v2425, %v2420
    %v2430 = vextract.low.u32 %v2429
    %v2431 = vextract.high.u32 %v2429
    %v2432 = vmul.u32 %v2425, %v2416
    %v2433 = vadd.s32 %v2428, %v2430
    %vm2434 = vc.u32 %v2428, %v2430
    %v2435 = vadd.s32 %v2431, 1
    %v2436 = vsel %vm2434, %v2435, %v2431
    %v2437 = vadd.s32 %v2432, %v2436
    %v2438 = vadd.s32 %v2437, 536870912
    %v2439 = vshrl.u32 %v2438, 30
    %v2440 = vshll.u32 %v2439, 30
    %v2441 = vsub.s32 %v2437, %v2440
    %vm2442 = vcmp.lt.s32.totalorder %v2441, 0
    %v2443 = vsub.s32 0, %v2441
    %v2444 = vsel %vm2442, %v2443, %v2441
    %v2445 = vclz %v2444
    %v2446 = vsub.s32 %v2445, 2
    %vm2447 = vcmp.gt.s32.totalorder 0, %v2446
    %v2448 = vsel %vm2447, 0, %v2446
    %v2449 = vsub.s32 32, %v2448
    %v2450 = vshll.u32 %v2441, %v2448
    %v2451 = vshrl.u32 %v2433, %v2449
    %v2452 = vor.u32 %v2450, %v2451
    %v2453 = vsub.s32 4294967266, %v2448
    %v2454 = vadd.s32 %v2453, 127
    %v2455 = vshll.u32 %v2454, 23
    %v2456 = vor.u32 4788187, %v2455
    %v2457 = vand.u32 2147483647, %v2456
    %v2459 = vcvt.s32.f32 %v2452
    %v2460 = vmul.f32 %v2459, %v2457
    %v2461 = vxor.u32 %v2460, 2147483648
    %v2462 = vsel %vm2379, %v2461, %v2460
    %v2463 = vsub.s32 4, %v2439
    %v2464 = vsel %vm2379, %v2463, %v2439
    %v2465 = vsel %vm2378, %v734, %v2462
    %v2466 = vsel %vm2378, 0, %v2464
    %v2467 = vcosq.f32.pop %v2465
    %v2468 = vsinq.f32.pop %v2465
    %vm2469 = vweird.f32 %v734
    %v2470 = vadd.s32 %v2466, 3
    %v2471 = vand.u32 %v2470, 3
    %vm2472 = vcmp.lt.s32.totalorder %v2471, 2
    %vm2473 = vcmp.eq.s32.totalorder %v2471, 0
    %v2474 = vxor.u32 %v2468, 2147483648
    %v2475 = vsel %vm2473, %v2467, %v2474
    %vm2476 = vcmp.eq.s32.totalorder %v2471, 2
    %v2477 = vxor.u32 %v2467, 2147483648
    %v2478 = vsel %vm2476, %v2477, %v2468
    %v2479 = vsel %vm2472, %v2475, %v2478
    %v2480 = vsel %vm2469, nan, %v2479
    %v2481 = vand.u32 2147483647, %v1334
    %vm2482 = vcmp.le.f32.partialorder %v2481, 0.7853982
    %vm2483 = vcmp.lt.s32.totalorder %v1334, 0
    %v2484 = vand.u32 %v1334, 2139095040
    %v2485 = vshrl.u32 %v2484, 23
    %v2486 = vsub.s32 %v2485, 127
    %v2487 = vand.u32 2147483647, %v1334
    %v2488 = vand.u32 %v2487, 8388607
    %v2489 = vor.u32 %v2488, 8388608
    %v2490 = vsub.s32 0, %v2489
    %v2491 = vadd.s32 %v2486, 1
    %vm2492 = vcmp.gt.s32.totalorder %v2491, 0
    %v2493 = vsel %vm2492, %v2491, 0
    %v2494 = vshrl.u32 %v2493, 5
    %v2495 = vand.u32 %v2493, 31
    %v2496 = vsub.s32 32, %v2495
    %v2497 = vshrl.u32 683565275, %v2496
    %v2498 = vshll.u32 683565275, %v2495
    %v2499 = vshrl.u32 2475754826, %v2496
    %v2500 = vor.u32 %v2498, %v2499
    %v2501 = vshll.u32 2475754826, %v2495
    %v2502 = vshrl.u32 2131351028, %v2496
    %v2503 = vor.u32 %v2501, %v2502
    %v2504 = vshll.u32 2131351028, %v2495
    %v2505 = vshrl.u32 2102212464, %v2496
    %v2506 = vor.u32 %v2504, %v2505
    %v2507 = vshll.u32 2102212464, %v2495
    %v2508 = vshrl.u32 920167782, %v2496
    %v2509 = vor.u32 %v2507, %v2508
    %v2510 = vshll.u32 920167782, %v2495
    %v2511 = vshrl.u32 1326507024, %v2496
    %v2512 = vor.u32 %v2510, %v2511
    %vm2513 = vcmp.lt.s32.totalorder %v2494, 1
    %vm2514 = vcmp.lt.s32.totalorder %v2494, 2
    %vm2515 = vcmp.lt.s32.totalorder %v2494, 3
    %vm2516 = vcmp.lt.s32.totalorder %v2494, 4
    %v2517 = vsel %vm2513, %v2497, %v2500
    %v2518 = vsel %vm2516, %v2506, 2102212464
    %v2519 = vsel %vm2515, %v2503, %v2518
    %v2520 = vsel %vm2514, %v2517, %v2519
    %v2521 = vsel %vm2513, %v2500, %v2503
    %v2522 = vsel %vm2516, %v2509, 920167782
    %v2523 = vsel %vm2515, %v2506, %v2522
    %v2524 = vsel %vm2514, %v2521, %v2523
    %v2525 = vsel %vm2513, %v2503, %v2506
    %v2526 = vsel %vm2516, %v2512, 1326507024
    %v2527 = vsel %vm2515, %v2509, %v2526
    %v2528 = vsel %vm2514, %v2525, %v2527
    %v2529 = vshll.u32 %v2489, 8
    %v2530 = vmul.u32.u64.compose %v2529, %v2528
    %v2531 = vextract.low.u32 %v2530
    %v2532 = vextract.high.u32 %v2530
    %v2533 = vmul.u32.u64.compose %v2529, %v2524
    %v2534 = vextract.low.u32 %v2533
    %v2535 = vextract.high.u32 %v2533
    %v2536 = vmul.u32 %v2529, %v2520
    %v2537 = vadd.s32 %v2532, %v2534
    %vm2538 = vc.u32 %v2532, %v2534
    %v2539 = vadd.s32 %v2535, 1
    %v2540 = vsel %vm2538, %v2539, %v2535
    %v2541 = vadd.s32 %v2536, %v2540
    %v2542 = vadd.s32 %v2541, 536870912
    %v2543 = vshrl.u32 %v2542, 30
    %v2544 = vshll.u32 %v2543, 30
    %v2545 = vsub.s32 %v2541, %v2544
    %vm2546 = vcmp.lt.s32.totalorder %v2545, 0
    %v2547 = vsub.s32 0, %v2545
    %v2548 = vsel %vm2546, %v2547, %v2545
    %v2549 = vclz %v2548
    %v2550 = vsub.s32 %v2549, 2
    %vm2551 = vcmp.gt.s32.totalorder 0, %v2550
    %v2552 = vsel %vm2551, 0, %v2550
    %v2553 = vsub.s32 32, %v2552
    %v2554 = vshll.u32 %v2545, %v2552
    %v2555 = vshrl.u32 %v2537, %v2553
    %v2556 = vor.u32 %v2554, %v2555
    %v2557 = vsub.s32 4294967266, %v2552
    %v2558 = vadd.s32 %v2557, 127
    %v2559 = vshll.u32 %v2558, 23
    %v2560 = vor.u32 4788187, %v2559
    %v2561 = vand.u32 2147483647, %v2560
    %v2563 = vcvt.s32.f32 %v2556
    %v2564 = vmul.f32 %v2563, %v2561
    %v2565 = vxor.u32 %v2564, 2147483648
    %v2566 = vsel %vm2483, %v2565, %v2564
    %v2567 = vsub.s32 4, %v2543
    %v2568 = vsel %vm2483, %v2567, %v2543
    %v2569 = vsel %vm2482, %v1334, %v2566
    %v2570 = vsel %vm2482, 0, %v2568
    %v2571 = vcosq.f32.pop %v2569
    %v2572 = vsinq.f32.pop %v2569
    %vm2573 = vweird.f32 %v1334
    %v2574 = vadd.s32 %v2570, 3
    %v2575 = vand.u32 %v2574, 3
    %vm2576 = vcmp.lt.s32.totalorder %v2575, 2
    %vm2577 = vcmp.eq.s32.totalorder %v2575, 0
    %v2578 = vxor.u32 %v2572, 2147483648
    %v2579 = vsel %vm2577, %v2571, %v2578
    %vm2580 = vcmp.eq.s32.totalorder %v2575, 2
    %v2581 = vxor.u32 %v2571, 2147483648
    %v2582 = vsel %vm2580, %v2581, %v2572
    %v2583 = vsel %vm2576, %v2579, %v2582
    %v2584 = vsel %vm2573, nan, %v2583
    %2585 = vst [vmem:[#allocation5] sm:$0xff] %v1440
    %2586 = vst [vmem:[#allocation5 + $0x8] sm:$0xff] %v1544
    %2587 = vst [vmem:[#allocation5 + $0x10] sm:$0xff] %v1648
    %2588 = vst [vmem:[#allocation5 + $0x18] sm:$0xff] %v1752
    %2589 = vst [vmem:[#allocation5 + $0x20] sm:$0xff] %v1856
    %2590 = vst [vmem:[#allocation5 + $0x28] sm:$0xff] %v1960
    %2591 = vst [vmem:[#allocation5 + $0x30] sm:$0xff] %v2064
    %2592 = vst [vmem:[#allocation5 + $0x38] sm:$0xff] %v2168
    %2593 = vst [vmem:[#allocation5 + $0x40] sm:$0xff] %v2272
    %2594 = vst [vmem:[#allocation5 + $0x48] sm:$0xff] %v2376
    %2595 = vst [vmem:[#allocation5 + $0x50] sm:$0xff] %v2480
    %2596 = vst [vmem:[#allocation5 + $0x58] sm:$0xff] %v2584
    // Predicated region
    $region18: #{tpu_custom_call.1} parent=1 // pred_check
      _
    $region19: #{tpu_custom_call.1} parent=1 // pred_check_branch
      %2598 = sbr.rel (0) target = $region21
    $region20: #{tpu_custom_call.1} parent=1 // pred_region
      %s2600 = ssub.s32 1536, 1536
      %2601 = vsyncadd [#allocation4], %s2600
      %s2602 = sshll.u32 [#allocation5], 4
      %s2603 = int_to_ptr.vmem [resolvable:$true] %s2602
      %2608 = dma.vmem_to_hbm [thread:$0]  %s2603, 1536, %s3, [#allocation4], 384, 384, 24
    $region21: #{tpu_custom_call.1} parent=1 // pred_fallthru
      _
    // Predicated region
    $region22: #{tpu_custom_call.1} parent=1 // pred_check
      _
    $region23: #{tpu_custom_call.1} parent=1 // pred_check_branch
      %2610 = sbr.rel (0) target = $region25
    $region24: #{tpu_custom_call.1} parent=1 // pred_region
      %2611 = dma.done [#allocation4], 1536
    $region25: #{tpu_custom_call.1} parent=1 // pred_fallthru
      _
    %2612 = vsyncpa [#allocation3], 1
    %2613 = vsyncpa [#allocation4], 1

</llo_original>
